<compile_context>
chip_gen: v5e
topology: v5e:2x2
jax: 0.10.0
libtpu: 0.0.40
codegen_flags: <defaults>
</compile_context>

<pallas_src>
import functools
import math

import jax
import jax.numpy as jnp
from jax.experimental import pallas as pl
from jax.experimental.pallas import tpu as pltpu


def _round_up(n, m):
    return ((n + m - 1) // m) * m


def _tpu_config():
    """Per-generation row-tile target and scoped VMEM limit."""
    try:
        kind = jax.devices()[0].device_kind.lower()
    except Exception:
        kind = ""
    if "v5" in kind or "v6" in kind:
        # 128 MiB physical VMEM: big row tiles, generous scoped limit.
        return {"target_rows": 512, "vmem_limit": 96 * 1024 * 1024}
    # v7x (64 MiB VMEM, 2 TCs) or unknown generation: smaller tiles / limit.
    return {"target_rows": 384, "vmem_limit": 40 * 1024 * 1024}


def _pick_row_tile(ho, wo, target_rows):
    """Largest divisor TH of ho such that TH * wo <= target_rows (>= 1)."""
    best = 1
    for d in range(1, ho + 1):
        if ho % d == 0 and d * wo <= target_rows:
            best = d
    return best


# ----------------------------- Pallas kernel --------------------------------

def _fused_conv_kernel(*refs, branch_meta, th, wo, cout, apply_relu):
    """out = relu?( sum_b sum_taps slice(a_b) @ W_b[t]  (+ identity tap)  + bias )

    refs layout: per branch [activation, (weights)], then bias, then output.
    branch_meta: tuple of (taps, has_weight, c_tap); each tap is a static
    (row_off, col_off, chan_off) element offset into that branch's activation.
    Only the row-tile start is dynamic.  Accumulation is f32 (MXU result path).
    """
    out_ref = refs[-1]
    bias_ref = refs[-2]
    r0 = pl.multiple_of(pl.program_id(1) * th, th)

    acc = None
    idx = 0
    for taps, has_w, c_tap in branch_meta:
        a_ref = refs[idx]
        idx += 1
        w_ref = None
        if has_w:
            w_ref = refs[idx]
            idx += 1
        for t, (ro, co, cho) in enumerate(taps):
            xt = a_ref[pl.ds(r0 + ro, th), co:co + wo, cho:cho + c_tap]
            xt = xt.reshape(th * wo, c_tap)
            if has_w:
                part = jnp.dot(xt, w_ref[t], preferred_element_type=jnp.float32)
            else:                                    # identity residual branch
                part = xt.astype(jnp.float32)
            acc = part if acc is None else acc + part
    acc = acc + bias_ref[...].astype(jnp.float32)    # folded BN bias, added once
    if apply_relu:
        acc = jnp.maximum(acc, 0.0)
    out_ref[...] = acc.reshape(th, wo, cout).astype(out_ref.dtype)


def fused_conv_block(branches, bias, out_shape, out_dtype, apply_relu, cfg):
    """branches: list of dicts with keys
         a     : (N, Ha, Wa, Ca) activation (zero-padded / space-to-depth'd)
         taps  : list of (row_off, col_off, chan_off) static offsets
         w     : (n_taps, c_tap, Cout) folded weights, or None for identity add
         c_tap : channels read per tap
       bias: (1, Cout) f32.  Output: (N, Ho, Wo, Cout) out_dtype."""
    n, ho, wo, cout = out_shape
    th = _pick_row_tile(ho, wo, cfg["target_rows"])
    n_tiles = ho // th

    # Advisory cost estimate for the XLA scheduler.
    m = n * ho * wo
    flops = 0
    bytes_accessed = math.prod(out_shape) * jnp.dtype(out_dtype).itemsize
    inputs, branch_meta = [], []
    for br in branches:
        a = br["a"]
        inputs.append(a)
        bytes_accessed += a.size * a.dtype.itemsize
        has_w = br["w"] is not None
        if has_w:
            inputs.append(br["w"])
            bytes_accessed += br["w"].size * br["w"].dtype.itemsize
            flops += 2 * m * len(br["taps"]) * br["c_tap"] * cout
        else:
            flops += m * cout
        branch_meta.append((tuple(br["taps"]), has_w, br["c_tap"]))
    inputs.append(bias)
    bytes_accessed += bias.size * bias.dtype.itemsize

    kernel = functools.partial(
        _fused_conv_kernel, branch_meta=tuple(branch_meta),
        th=th, wo=wo, cout=cout, apply_relu=apply_relu)

    def build_and_call(single_buffer_consts):
        const_kw = ({"pipeline_mode": pl.Buffered(1)}
                    if single_buffer_consts else {})
        in_specs = []
        for br in branches:
            a = br["a"]
            # Full per-image block; constant across row tiles -> fetched once
            # per batch element by the pipeline.
            in_specs.append(pl.BlockSpec((None,) + a.shape[1:],
                                         lambda ni, ti: (ni, 0, 0, 0)))
            if br["w"] is not None:
                in_specs.append(pl.BlockSpec(br["w"].shape,
                                             lambda ni, ti: (0, 0, 0),
                                             **const_kw))
        in_specs.append(pl.BlockSpec(bias.shape, lambda ni, ti: (0, 0),
                                     **const_kw))

        return pl.pallas_call(
            kernel,
            out_shape=jax.ShapeDtypeStruct(out_shape, out_dtype),
            grid=(n, n_tiles),
            in_specs=in_specs,
            out_specs=pl.BlockSpec((None, th, wo, cout),
                                   lambda ni, ti: (ni, ti, 0, 0)),
            compiler_params=pltpu.CompilerParams(
                dimension_semantics=("parallel", "parallel"),
                vmem_limit_bytes=cfg["vmem_limit"]),
            cost_estimate=pl.CostEstimate(flops=flops, transcendentals=0,
                                          bytes_accessed=bytes_accessed),
        )(*inputs)

    try:
        return build_and_call(True)     # single-buffer constant weights/bias
    except Exception:
        return build_and_call(False)    # fallback: default double buffering


# ------------------------------- JAX glue ------------------------------------

def fold_bn(bn, eps=1e-5):
    """Eval-mode BN -> per-channel (scale, bias), each shaped (C,)."""
    scale = bn["gamma"] * jax.lax.rsqrt(bn["var"] + eps)
    bias = bn["beta"] - bn["mean"] * scale
    return scale, bias


def conv3x3_weight_taps(w_oihw, scale, dtype):
    """(Cout, Cin, 3, 3) with BN scale folded -> (9, Cin, Cout), taps dy*3+dx."""
    cout, cin = w_oihw.shape[0], w_oihw.shape[1]
    w = w_oihw * scale[:, None, None, None]
    return jnp.transpose(w, (2, 3, 1, 0)).reshape(9, cin, cout).astype(dtype)


def conv3x3_taps(stride, c):
    """Static (row_off, col_off, chan_off) per 3x3 tap in s2d coordinates."""
    taps = []
    for dy in range(3):
        for dx in range(3):
            taps.append((dy // stride, dx // stride,
                         ((dy % stride) * stride + dx % stride) * c))
    return taps


def shortcut_tap(stride, c):
    """1x1 / identity tap: x[s*ho, s*wo] == padded[s*ho + 1, s*wo + 1]."""
    return [(1 // stride, 1 // stride,
             ((1 % stride) * stride + 1 % stride) * c)]


def space_to_depth_pad(x_nhwc, stride):
    """Zero-pad spatially by 1, then fold the (stride x stride) phases into the
    channel axis so every conv tap becomes a contiguous slice."""
    n, h, w, c = x_nhwc.shape
    hp, wp = h + 2, w + 2
    hp2, wp2 = _round_up(hp, stride), _round_up(wp, stride)
    xp = jnp.pad(x_nhwc, ((0, 0), (1, 1 + hp2 - hp), (1, 1 + wp2 - wp), (0, 0)))
    if stride == 1:
        return xp
    xp = xp.reshape(n, hp2 // stride, stride, wp2 // stride, stride, c)
    xp = jnp.transpose(xp, (0, 1, 3, 2, 4, 5))
    return xp.reshape(n, hp2 // stride, wp2 // stride, stride * stride * c)


def basic_block_forward(x_nchw, params, stride, compute_dtype=jnp.bfloat16):
    cfg = _tpu_config()
    x = jnp.transpose(x_nchw, (0, 2, 3, 1))          # NHWC
    n, h, w, cin = x.shape
    cout = params["w1"].shape[0]
    ho = (h - 1) // stride + 1
    wo = (w - 1) // stride + 1

    x_c = x.astype(compute_dtype)
    a_x = space_to_depth_pad(x_c, stride)            # (N, Ha, Wa, s*s*Cin)

    # --- conv1 (3x3, stride) + bn1 + relu : one fused call --------------------
    s1, b1 = fold_bn(params["bn1"])
    w1 = conv3x3_weight_taps(params["w1"], s1, compute_dtype)
    out1 = fused_conv_block(
        branches=[dict(a=a_x, taps=conv3x3_taps(stride, cin), w=w1, c_tap=cin)],
        bias=b1.reshape(1, cout).astype(jnp.float32),
        out_shape=(n, ho, wo, cout), out_dtype=compute_dtype,
        apply_relu=True, cfg=cfg)

    # --- conv2 (3x3, 1) + bn2 + shortcut + relu : one fused call --------------
    a1 = jnp.pad(out1, ((0, 0), (1, 1), (1, 1), (0, 0)))
    s2, b2 = fold_bn(params["bn2"])
    w2 = conv3x3_weight_taps(params["w2"], s2, compute_dtype)

    branches = [dict(a=a1, taps=conv3x3_taps(1, cout), w=w2, c_tap=cout)]
    bias = b2
    if stride != 1 or cin != cout:
        # Projection shortcut: 1x1 strided conv + BN, fused as a 2nd branch
        # reading the *same* s2d input tensor as conv1.
        ss, bs = fold_bn(params["bn_s"])
        ws = jnp.transpose(params["ws"][:, :, 0, 0] * ss[:, None], (1, 0))
        branches.append(dict(a=a_x, taps=shortcut_tap(stride, cin),
                             w=ws[None].astype(compute_dtype), c_tap=cin))
        bias = bias + bs
    else:
        # Identity shortcut: residual tap added directly (no matmul, no padding)
        branches.append(dict(a=a_x, taps=shortcut_tap(1, cin), w=None, c_tap=cin))

    out = fused_conv_block(
        branches, bias=bias.reshape(1, cout).astype(jnp.float32),
        out_shape=(n, ho, wo, cout), out_dtype=jnp.float32,
        apply_relu=True, cfg=cfg)

    return jnp.transpose(out, (0, 3, 1, 2))          # back to NCHW


# ------------------------- pure-JAX reference (check) ------------------------

def _ref_conv(x_nhwc, w_oihw, stride, pad):
    w_hwio = jnp.transpose(w_oihw, (2, 3, 1, 0))
    return jax.lax.conv_general_dilated(
        x_nhwc, w_hwio, (stride, stride), [(pad, pad), (pad, pad)],
        dimension_numbers=("NHWC", "HWIO", "NHWC"))


def _ref_bn(x, bn, eps=1e-5):
    return (x - bn["mean"]) * jax.lax.rsqrt(bn["var"] + eps) * bn["gamma"] + bn["beta"]


def basic_block_reference(x_nchw, params, stride):
    x = jnp.transpose(x_nchw, (0, 2, 3, 1)).astype(jnp.float32)
    cin = x.shape[-1]
    cout = params["w1"].shape[0]
    out = jax.nn.relu(_ref_bn(_ref_conv(x, params["w1"], stride, 1), params["bn1"]))
    out = _ref_bn(_ref_conv(out, params["w2"], 1, 1), params["bn2"])
    if stride != 1 or cin != cout:
        sc = _ref_bn(_ref_conv(x, params["ws"], stride, 0), params["bn_s"])
    else:
        sc = x
    out = jax.nn.relu(out + sc)
    return jnp.transpose(out, (0, 3, 1, 2))


# --------------------------------- main --------------------------------------

def make_params(key, cin, cout, has_shortcut):
    ks = jax.random.split(key, 12)

    def bn_params(k0, k1, k2, k3, c):
        return dict(
            gamma=jax.random.uniform(k0, (c,), jnp.float32, 0.5, 1.5),
            beta=0.1 * jax.random.normal(k1, (c,), jnp.float32),
            mean=0.1 * jax.random.normal(k2, (c,), jnp.float32),
            var=jax.random.uniform(k3, (c,), jnp.float32, 0.5, 1.5),
        )

    params = dict(
        w1=0.1 * jax.random.normal(ks[0], (cout, cin, 3, 3), jnp.float32),
        bn1=bn_params(ks[1], ks[2], ks[3], ks[4], cout),
        w2=0.1 * jax.random.normal(ks[5], (cout, cout, 3, 3), jnp.float32),
        bn2=bn_params(ks[6], ks[7], ks[8], ks[9], cout),
    )
    if has_shortcut:
        params["ws"] = 0.1 * jax.random.normal(ks[10], (cout, cin, 1, 1), jnp.float32)
        k = jax.random.split(ks[11], 4)
        params["bn_s"] = bn_params(k[0], k[1], k[2], k[3], cout)
    return params


if __name__ == "__main__":
    key = jax.random.PRNGKey(0)
    kx, kp1, kp2 = jax.random.split(key, 3)

    # Case 1: downsampling block (stride=2, Cin != Cout -> conv1x1+BN shortcut)
    N, Cin, H, W, Cout, stride = 2, 4, 16, 16, 8, 2
    x = jax.random.normal(kx, (N, Cin, H, W), jnp.float32)
    params = make_params(kp1, Cin, Cout, has_shortcut=True)
    ref = basic_block_reference(x, params, stride)

    out_f32 = jax.block_until_ready(
        basic_block_forward(x, params, stride, compute_dtype=jnp.float32))
    assert out_f32.shape == (N, Cout, H // stride, W // stride), out_f32.shape
    assert jnp.allclose(out_f32, ref, atol=1e-4, rtol=1e-4), \
        float(jnp.abs(out_f32 - ref).max())

    out_bf16 = jax.block_until_ready(
        basic_block_forward(x, params, stride, compute_dtype=jnp.bfloat16))
    assert jnp.allclose(out_bf16, ref, atol=5e-2, rtol=5e-2), \
        float(jnp.abs(out_bf16 - ref).max())

    # Case 2: identity-shortcut block (stride=1, Cin == Cout)
    params2 = make_params(kp2, Cout, Cout, has_shortcut=False)
    x2 = jax.random.normal(kx, (N, Cout, H, W), jnp.float32)
    ref2 = basic_block_reference(x2, params2, 1)

    out2_f32 = jax.block_until_ready(
        basic_block_forward(x2, params2, 1, compute_dtype=jnp.float32))
    assert out2_f32.shape == (N, Cout, H, W), out2_f32.shape
    assert jnp.allclose(out2_f32, ref2, atol=1e-4, rtol=1e-4), \
        float(jnp.abs(out2_f32 - ref2).max())

    out2_bf16 = jax.block_until_ready(
        basic_block_forward(x2, params2, 1, compute_dtype=jnp.bfloat16))
    assert jnp.allclose(out2_bf16, ref2, atol=5e-2, rtol=5e-2), \
        float(jnp.abs(out2_bf16 - ref2).max())

    print("KERNEL_OK")
</pallas_src>

<mosaic_0001>
module attributes {stable_mosaic.version = 11 : i64} {
  func.func @_fused_conv_kernel(%arg0: i32, %arg1: i32, %arg2: memref<1x9x9x16xf32, #tpu.memory_space<vmem>>, %arg3: memref<9x4x8xf32, #tpu.memory_space<vmem>>, %arg4: memref<1x8xf32, #tpu.memory_space<vmem>>, %arg5: memref<1x8x8x8xf32, #tpu.memory_space<vmem>>) attributes {dimension_semantics = [#tpu.dimension_semantics<parallel>, #tpu.dimension_semantics<parallel>], iteration_bounds = array<i64: 2, 1>, scalar_prefetch = 0 : i64, scratch_operands = 0 : i64, tpu.core_type = #tpu.core_type<tc>, window_params = [{transform_indices = @transform_0, window_bounds = array<i64: 1, 9, 9, 16>}, {pipeline_mode = #tpu.pipeline_mode<synchronous>, transform_indices = @transform_1, window_bounds = array<i64: 9, 4, 8>}, {pipeline_mode = #tpu.pipeline_mode<synchronous>, transform_indices = @transform_2, window_bounds = array<i64: 1, 8>}, {transform_indices = @transform_3, window_bounds = array<i64: 1, 8, 8, 8>}]} {
    %c8_i32 = arith.constant 8 : i32
    %0 = arith.muli %arg1, %c8_i32 : i32
    %1 = tpu.assume_multiple %0, 8 : i32
    %c0_i32 = arith.constant 0 : i32
    %2 = arith.addi %1, %c0_i32 : i32
    %c0 = arith.constant 0 : index
    %3 = arith.index_cast %2 : i32 to index
    %c0_0 = arith.constant 0 : index
    %c0_1 = arith.constant 0 : index
    %4 = vector.load %arg2[%c0, %3, %c0_0, %c0_1] : memref<1x9x9x16xf32, #tpu.memory_space<vmem>>, vector<1x8x8x4xf32>
    %5 = vector.shape_cast %4 : vector<1x8x8x4xf32> to vector<8x8x4xf32>
    %6 = vector.shape_cast %5 : vector<8x8x4xf32> to vector<64x4xf32>
    %c0_2 = arith.constant 0 : index
    %c0_3 = arith.constant 0 : index
    %c0_4 = arith.constant 0 : index
    %7 = vector.load %arg3[%c0_2, %c0_3, %c0_4] : memref<9x4x8xf32, #tpu.memory_space<vmem>>, vector<1x4x8xf32>
    %8 = vector.shape_cast %7 : vector<1x4x8xf32> to vector<4x8xf32>
    %cst = arith.constant dense<0.000000e+00> : vector<64x8xf32>
    %9 = tpu.matmul %6, %8, %cst {dimension_numbers = #tpu.dot_dimension_numbers<[1], [0], [0], [1], [0, 0, 1, 1], [], []>} : vector<64x4xf32>, vector<4x8xf32>, vector<64x8xf32> -> vector<64x8xf32>
    %c0_i32_5 = arith.constant 0 : i32
    %10 = arith.addi %1, %c0_i32_5 : i32
    %c0_6 = arith.constant 0 : index
    %11 = arith.index_cast %10 : i32 to index
    %c0_7 = arith.constant 0 : index
    %c4 = arith.constant 4 : index
    %12 = vector.load %arg2[%c0_6, %11, %c0_7, %c4] : memref<1x9x9x16xf32, #tpu.memory_space<vmem>>, vector<1x8x8x4xf32>
    %13 = vector.shape_cast %12 : vector<1x8x8x4xf32> to vector<8x8x4xf32>
    %14 = vector.shape_cast %13 : vector<8x8x4xf32> to vector<64x4xf32>
    %c1 = arith.constant 1 : index
    %c0_8 = arith.constant 0 : index
    %c0_9 = arith.constant 0 : index
    %15 = vector.load %arg3[%c1, %c0_8, %c0_9] : memref<9x4x8xf32, #tpu.memory_space<vmem>>, vector<1x4x8xf32>
    %16 = vector.shape_cast %15 : vector<1x4x8xf32> to vector<4x8xf32>
    %cst_10 = arith.constant dense<0.000000e+00> : vector<64x8xf32>
    %17 = tpu.matmul %14, %16, %cst_10 {dimension_numbers = #tpu.dot_dimension_numbers<[1], [0], [0], [1], [0, 0, 1, 1], [], []>} : vector<64x4xf32>, vector<4x8xf32>, vector<64x8xf32> -> vector<64x8xf32>
    %18 = arith.addf %9, %17 : vector<64x8xf32>
    %c0_i32_11 = arith.constant 0 : i32
    %19 = arith.addi %1, %c0_i32_11 : i32
    %c0_12 = arith.constant 0 : index
    %20 = arith.index_cast %19 : i32 to index
    %c1_13 = arith.constant 1 : index
    %c0_14 = arith.constant 0 : index
    %21 = vector.load %arg2[%c0_12, %20, %c1_13, %c0_14] : memref<1x9x9x16xf32, #tpu.memory_space<vmem>>, vector<1x8x8x4xf32>
    %22 = vector.shape_cast %21 : vector<1x8x8x4xf32> to vector<8x8x4xf32>
    %23 = vector.shape_cast %22 : vector<8x8x4xf32> to vector<64x4xf32>
    %c2 = arith.constant 2 : index
    %c0_15 = arith.constant 0 : index
    %c0_16 = arith.constant 0 : index
    %24 = vector.load %arg3[%c2, %c0_15, %c0_16] : memref<9x4x8xf32, #tpu.memory_space<vmem>>, vector<1x4x8xf32>
    %25 = vector.shape_cast %24 : vector<1x4x8xf32> to vector<4x8xf32>
    %cst_17 = arith.constant dense<0.000000e+00> : vector<64x8xf32>
    %26 = tpu.matmul %23, %25, %cst_17 {dimension_numbers = #tpu.dot_dimension_numbers<[1], [0], [0], [1], [0, 0, 1, 1], [], []>} : vector<64x4xf32>, vector<4x8xf32>, vector<64x8xf32> -> vector<64x8xf32>
    %27 = arith.addf %18, %26 : vector<64x8xf32>
    %c0_i32_18 = arith.constant 0 : i32
    %28 = arith.addi %1, %c0_i32_18 : i32
    %c0_19 = arith.constant 0 : index
    %29 = arith.index_cast %28 : i32 to index
    %c0_20 = arith.constant 0 : index
    %c8 = arith.constant 8 : index
    %30 = vector.load %arg2[%c0_19, %29, %c0_20, %c8] : memref<1x9x9x16xf32, #tpu.memory_space<vmem>>, vector<1x8x8x4xf32>
    %31 = vector.shape_cast %30 : vector<1x8x8x4xf32> to vector<8x8x4xf32>
    %32 = vector.shape_cast %31 : vector<8x8x4xf32> to vector<64x4xf32>
    %c3 = arith.constant 3 : index
    %c0_21 = arith.constant 0 : index
    %c0_22 = arith.constant 0 : index
    %33 = vector.load %arg3[%c3, %c0_21, %c0_22] : memref<9x4x8xf32, #tpu.memory_space<vmem>>, vector<1x4x8xf32>
    %34 = vector.shape_cast %33 : vector<1x4x8xf32> to vector<4x8xf32>
    %cst_23 = arith.constant dense<0.000000e+00> : vector<64x8xf32>
    %35 = tpu.matmul %32, %34, %cst_23 {dimension_numbers = #tpu.dot_dimension_numbers<[1], [0], [0], [1], [0, 0, 1, 1], [], []>} : vector<64x4xf32>, vector<4x8xf32>, vector<64x8xf32> -> vector<64x8xf32>
    %36 = arith.addf %27, %35 : vector<64x8xf32>
    %c0_i32_24 = arith.constant 0 : i32
    %37 = arith.addi %1, %c0_i32_24 : i32
    %c0_25 = arith.constant 0 : index
    %38 = arith.index_cast %37 : i32 to index
    %c0_26 = arith.constant 0 : index
    %c12 = arith.constant 12 : index
    %39 = vector.load %arg2[%c0_25, %38, %c0_26, %c12] : memref<1x9x9x16xf32, #tpu.memory_space<vmem>>, vector<1x8x8x4xf32>
    %40 = vector.shape_cast %39 : vector<1x8x8x4xf32> to vector<8x8x4xf32>
    %41 = vector.shape_cast %40 : vector<8x8x4xf32> to vector<64x4xf32>
    %c4_27 = arith.constant 4 : index
    %c0_28 = arith.constant 0 : index
    %c0_29 = arith.constant 0 : index
    %42 = vector.load %arg3[%c4_27, %c0_28, %c0_29] : memref<9x4x8xf32, #tpu.memory_space<vmem>>, vector<1x4x8xf32>
    %43 = vector.shape_cast %42 : vector<1x4x8xf32> to vector<4x8xf32>
    %cst_30 = arith.constant dense<0.000000e+00> : vector<64x8xf32>
    %44 = tpu.matmul %41, %43, %cst_30 {dimension_numbers = #tpu.dot_dimension_numbers<[1], [0], [0], [1], [0, 0, 1, 1], [], []>} : vector<64x4xf32>, vector<4x8xf32>, vector<64x8xf32> -> vector<64x8xf32>
    %45 = arith.addf %36, %44 : vector<64x8xf32>
    %c0_i32_31 = arith.constant 0 : i32
    %46 = arith.addi %1, %c0_i32_31 : i32
    %c0_32 = arith.constant 0 : index
    %47 = arith.index_cast %46 : i32 to index
    %c1_33 = arith.constant 1 : index
    %c8_34 = arith.constant 8 : index
    %48 = vector.load %arg2[%c0_32, %47, %c1_33, %c8_34] : memref<1x9x9x16xf32, #tpu.memory_space<vmem>>, vector<1x8x8x4xf32>
    %49 = vector.shape_cast %48 : vector<1x8x8x4xf32> to vector<8x8x4xf32>
    %50 = vector.shape_cast %49 : vector<8x8x4xf32> to vector<64x4xf32>
    %c5 = arith.constant 5 : index
    %c0_35 = arith.constant 0 : index
    %c0_36 = arith.constant 0 : index
    %51 = vector.load %arg3[%c5, %c0_35, %c0_36] : memref<9x4x8xf32, #tpu.memory_space<vmem>>, vector<1x4x8xf32>
    %52 = vector.shape_cast %51 : vector<1x4x8xf32> to vector<4x8xf32>
    %cst_37 = arith.constant dense<0.000000e+00> : vector<64x8xf32>
    %53 = tpu.matmul %50, %52, %cst_37 {dimension_numbers = #tpu.dot_dimension_numbers<[1], [0], [0], [1], [0, 0, 1, 1], [], []>} : vector<64x4xf32>, vector<4x8xf32>, vector<64x8xf32> -> vector<64x8xf32>
    %54 = arith.addf %45, %53 : vector<64x8xf32>
    %c1_i32 = arith.constant 1 : i32
    %55 = arith.addi %1, %c1_i32 : i32
    %c0_38 = arith.constant 0 : index
    %56 = arith.index_cast %55 : i32 to index
    %c0_39 = arith.constant 0 : index
    %c0_40 = arith.constant 0 : index
    %57 = vector.load %arg2[%c0_38, %56, %c0_39, %c0_40] : memref<1x9x9x16xf32, #tpu.memory_space<vmem>>, vector<1x8x8x4xf32>
    %58 = vector.shape_cast %57 : vector<1x8x8x4xf32> to vector<8x8x4xf32>
    %59 = vector.shape_cast %58 : vector<8x8x4xf32> to vector<64x4xf32>
    %c6 = arith.constant 6 : index
    %c0_41 = arith.constant 0 : index
    %c0_42 = arith.constant 0 : index
    %60 = vector.load %arg3[%c6, %c0_41, %c0_42] : memref<9x4x8xf32, #tpu.memory_space<vmem>>, vector<1x4x8xf32>
    %61 = vector.shape_cast %60 : vector<1x4x8xf32> to vector<4x8xf32>
    %cst_43 = arith.constant dense<0.000000e+00> : vector<64x8xf32>
    %62 = tpu.matmul %59, %61, %cst_43 {dimension_numbers = #tpu.dot_dimension_numbers<[1], [0], [0], [1], [0, 0, 1, 1], [], []>} : vector<64x4xf32>, vector<4x8xf32>, vector<64x8xf32> -> vector<64x8xf32>
    %63 = arith.addf %54, %62 : vector<64x8xf32>
    %c1_i32_44 = arith.constant 1 : i32
    %64 = arith.addi %1, %c1_i32_44 : i32
    %c0_45 = arith.constant 0 : index
    %65 = arith.index_cast %64 : i32 to index
    %c0_46 = arith.constant 0 : index
    %c4_47 = arith.constant 4 : index
    %66 = vector.load %arg2[%c0_45, %65, %c0_46, %c4_47] : memref<1x9x9x16xf32, #tpu.memory_space<vmem>>, vector<1x8x8x4xf32>
    %67 = vector.shape_cast %66 : vector<1x8x8x4xf32> to vector<8x8x4xf32>
    %68 = vector.shape_cast %67 : vector<8x8x4xf32> to vector<64x4xf32>
    %c7 = arith.constant 7 : index
    %c0_48 = arith.constant 0 : index
    %c0_49 = arith.constant 0 : index
    %69 = vector.load %arg3[%c7, %c0_48, %c0_49] : memref<9x4x8xf32, #tpu.memory_space<vmem>>, vector<1x4x8xf32>
    %70 = vector.shape_cast %69 : vector<1x4x8xf32> to vector<4x8xf32>
    %cst_50 = arith.constant dense<0.000000e+00> : vector<64x8xf32>
    %71 = tpu.matmul %68, %70, %cst_50 {dimension_numbers = #tpu.dot_dimension_numbers<[1], [0], [0], [1], [0, 0, 1, 1], [], []>} : vector<64x4xf32>, vector<4x8xf32>, vector<64x8xf32> -> vector<64x8xf32>
    %72 = arith.addf %63, %71 : vector<64x8xf32>
    %c1_i32_51 = arith.constant 1 : i32
    %73 = arith.addi %1, %c1_i32_51 : i32
    %c0_52 = arith.constant 0 : index
    %74 = arith.index_cast %73 : i32 to index
    %c1_53 = arith.constant 1 : index
    %c0_54 = arith.constant 0 : index
    %75 = vector.load %arg2[%c0_52, %74, %c1_53, %c0_54] : memref<1x9x9x16xf32, #tpu.memory_space<vmem>>, vector<1x8x8x4xf32>
    %76 = vector.shape_cast %75 : vector<1x8x8x4xf32> to vector<8x8x4xf32>
    %77 = vector.shape_cast %76 : vector<8x8x4xf32> to vector<64x4xf32>
    %c8_55 = arith.constant 8 : index
    %c0_56 = arith.constant 0 : index
    %c0_57 = arith.constant 0 : index
    %78 = vector.load %arg3[%c8_55, %c0_56, %c0_57] : memref<9x4x8xf32, #tpu.memory_space<vmem>>, vector<1x4x8xf32>
    %79 = vector.shape_cast %78 : vector<1x4x8xf32> to vector<4x8xf32>
    %cst_58 = arith.constant dense<0.000000e+00> : vector<64x8xf32>
    %80 = tpu.matmul %77, %79, %cst_58 {dimension_numbers = #tpu.dot_dimension_numbers<[1], [0], [0], [1], [0, 0, 1, 1], [], []>} : vector<64x4xf32>, vector<4x8xf32>, vector<64x8xf32> -> vector<64x8xf32>
    %81 = arith.addf %72, %80 : vector<64x8xf32>
    %c0_59 = arith.constant 0 : index
    %c0_60 = arith.constant 0 : index
    %82 = vector.load %arg4[%c0_59, %c0_60] : memref<1x8xf32, #tpu.memory_space<vmem>>, vector<1x8xf32>
    %83 = vector.broadcast %82 : vector<1x8xf32> to vector<64x8xf32>
    %84 = arith.addf %81, %83 : vector<64x8xf32>
    %cst_61 = arith.constant 0.000000e+00 : f32
    %85 = vector.broadcast %cst_61 : f32 to vector<64x8xf32>
    %86 = arith.maximumf %84, %85 : vector<64x8xf32>
    %87 = vector.shape_cast %86 : vector<64x8xf32> to vector<8x8x8xf32>
    %c0_62 = arith.constant 0 : index
    %c0_63 = arith.constant 0 : index
    %c0_64 = arith.constant 0 : index
    %c0_65 = arith.constant 0 : index
    %88 = vector.load %arg5[%c0_62, %c0_63, %c0_64, %c0_65] : memref<1x8x8x8xf32, #tpu.memory_space<vmem>>, vector<1x8x8x8xf32>
    %89 = vector.shape_cast %88 : vector<1x8x8x8xf32> to vector<8x8x8xf32>
    %90 = vector.shape_cast %87 : vector<8x8x8xf32> to vector<1x8x8x8xf32>
    tpu.vector_store %arg5[%c0_62, %c0_63, %c0_64, %c0_65], %90 {strides = array<i32>} : memref<1x8x8x8xf32, #tpu.memory_space<vmem>>, vector<1x8x8x8xf32>,
    return
  }
  func.func @transform_0(%arg0: i32, %arg1: i32) -> (i32, i32, i32, i32) {
    %c0_i32 = arith.constant 0 : i32
    %c0_i32_0 = arith.constant 0 : i32
    %c0_i32_1 = arith.constant 0 : i32
    %c0_i32_2 = arith.constant 0 : i32
    return %arg0, %c0_i32, %c0_i32_0, %c0_i32_1 : i32, i32, i32, i32
  }
  func.func @transform_1(%arg0: i32, %arg1: i32) -> (i32, i32, i32) {
    %c0_i32 = arith.constant 0 : i32
    %c0_i32_0 = arith.constant 0 : i32
    %c0_i32_1 = arith.constant 0 : i32
    %c0_i32_2 = arith.constant 0 : i32
    return %c0_i32, %c0_i32_0, %c0_i32_1 : i32, i32, i32
  }
  func.func @transform_2(%arg0: i32, %arg1: i32) -> (i32, i32) {
    %c0_i32 = arith.constant 0 : i32
    %c0_i32_0 = arith.constant 0 : i32
    %c0_i32_1 = arith.constant 0 : i32
    return %c0_i32, %c0_i32_0 : i32, i32
  }
  func.func @transform_3(%arg0: i32, %arg1: i32) -> (i32, i32, i32, i32) {
    %c0_i32 = arith.constant 0 : i32
    %c0_i32_0 = arith.constant 0 : i32
    %c0_i32_1 = arith.constant 0 : i32
    return %arg0, %arg1, %c0_i32, %c0_i32_0 : i32, i32, i32, i32
  }
}

module attributes {stable_mosaic.version = 11 : i64} {
  func.func @_fused_conv_kernel(%arg0: i32, %arg1: i32, %arg2: memref<1x9x9x16xf32, #tpu.memory_space<vmem>>, %arg3: memref<9x4x8xf32, #tpu.memory_space<vmem>>, %arg4: memref<1x8xf32, #tpu.memory_space<vmem>>, %arg5: memref<1x8x8x8xf32, #tpu.memory_space<vmem>>) attributes {dimension_semantics = [#tpu.dimension_semantics<parallel>, #tpu.dimension_semantics<parallel>], iteration_bounds = array<i64: 2, 1>, scalar_prefetch = 0 : i64, scratch_operands = 0 : i64, tpu.core_type = #tpu.core_type<tc>, window_params = [{transform_indices = @transform_0, window_bounds = array<i64: 1, 9, 9, 16>}, {pipeline_mode = #tpu.pipeline_mode<synchronous>, transform_indices = @transform_1, window_bounds = array<i64: 9, 4, 8>}, {pipeline_mode = #tpu.pipeline_mode<synchronous>, transform_indices = @transform_2, window_bounds = array<i64: 1, 8>}, {transform_indices = @transform_3, window_bounds = array<i64: 1, 8, 8, 8>}]} {
    %c8_i32 = arith.constant 8 : i32
    %0 = arith.muli %arg1, %c8_i32 : i32
    %1 = tpu.assume_multiple %0, 8 : i32
    %c0_i32 = arith.constant 0 : i32
    %2 = arith.addi %1, %c0_i32 : i32
    %c0 = arith.constant 0 : index
    %3 = arith.index_cast %2 : i32 to index
    %c0_0 = arith.constant 0 : index
    %c0_1 = arith.constant 0 : index
    %4 = vector.load %arg2[%c0, %3, %c0_0, %c0_1] : memref<1x9x9x16xf32, #tpu.memory_space<vmem>>, vector<1x8x8x4xf32>
    %5 = vector.shape_cast %4 : vector<1x8x8x4xf32> to vector<8x8x4xf32>
    %6 = vector.shape_cast %5 : vector<8x8x4xf32> to vector<64x4xf32>
    %c0_2 = arith.constant 0 : index
    %c0_3 = arith.constant 0 : index
    %c0_4 = arith.constant 0 : index
    %7 = vector.load %arg3[%c0_2, %c0_3, %c0_4] : memref<9x4x8xf32, #tpu.memory_space<vmem>>, vector<1x4x8xf32>
    %8 = vector.shape_cast %7 : vector<1x4x8xf32> to vector<4x8xf32>
    %cst = arith.constant dense<0.000000e+00> : vector<64x8xf32>
    %9 = tpu.matmul %6, %8, %cst {dimension_numbers = #tpu.dot_dimension_numbers<[1], [0], [0], [1], [0, 0, 1, 1], [], []>} : vector<64x4xf32>, vector<4x8xf32>, vector<64x8xf32> -> vector<64x8xf32>
    %c0_i32_5 = arith.constant 0 : i32
    %10 = arith.addi %1, %c0_i32_5 : i32
    %c0_6 = arith.constant 0 : index
    %11 = arith.index_cast %10 : i32 to index
    %c0_7 = arith.constant 0 : index
    %c4 = arith.constant 4 : index
    %12 = vector.load %arg2[%c0_6, %11, %c0_7, %c4] : memref<1x9x9x16xf32, #tpu.memory_space<vmem>>, vector<1x8x8x4xf32>
    %13 = vector.shape_cast %12 : vector<1x8x8x4xf32> to vector<8x8x4xf32>
    %14 = vector.shape_cast %13 : vector<8x8x4xf32> to vector<64x4xf32>
    %c1 = arith.constant 1 : index
    %c0_8 = arith.constant 0 : index
    %c0_9 = arith.constant 0 : index
    %15 = vector.load %arg3[%c1, %c0_8, %c0_9] : memref<9x4x8xf32, #tpu.memory_space<vmem>>, vector<1x4x8xf32>
    %16 = vector.shape_cast %15 : vector<1x4x8xf32> to vector<4x8xf32>
    %cst_10 = arith.constant dense<0.000000e+00> : vector<64x8xf32>
    %17 = tpu.matmul %14, %16, %cst_10 {dimension_numbers = #tpu.dot_dimension_numbers<[1], [0], [0], [1], [0, 0, 1, 1], [], []>} : vector<64x4xf32>, vector<4x8xf32>, vector<64x8xf32> -> vector<64x8xf32>
    %18 = arith.addf %9, %17 : vector<64x8xf32>
    %c0_i32_11 = arith.constant 0 : i32
    %19 = arith.addi %1, %c0_i32_11 : i32
    %c0_12 = arith.constant 0 : index
    %20 = arith.index_cast %19 : i32 to index
    %c1_13 = arith.constant 1 : index
    %c0_14 = arith.constant 0 : index
    %21 = vector.load %arg2[%c0_12, %20, %c1_13, %c0_14] : memref<1x9x9x16xf32, #tpu.memory_space<vmem>>, vector<1x8x8x4xf32>
    %22 = vector.shape_cast %21 : vector<1x8x8x4xf32> to vector<8x8x4xf32>
    %23 = vector.shape_cast %22 : vector<8x8x4xf32> to vector<64x4xf32>
    %c2 = arith.constant 2 : index
    %c0_15 = arith.constant 0 : index
    %c0_16 = arith.constant 0 : index
    %24 = vector.load %arg3[%c2, %c0_15, %c0_16] : memref<9x4x8xf32, #tpu.memory_space<vmem>>, vector<1x4x8xf32>
    %25 = vector.shape_cast %24 : vector<1x4x8xf32> to vector<4x8xf32>
    %cst_17 = arith.constant dense<0.000000e+00> : vector<64x8xf32>
    %26 = tpu.matmul %23, %25, %cst_17 {dimension_numbers = #tpu.dot_dimension_numbers<[1], [0], [0], [1], [0, 0, 1, 1], [], []>} : vector<64x4xf32>, vector<4x8xf32>, vector<64x8xf32> -> vector<64x8xf32>
    %27 = arith.addf %18, %26 : vector<64x8xf32>
    %c0_i32_18 = arith.constant 0 : i32
    %28 = arith.addi %1, %c0_i32_18 : i32
    %c0_19 = arith.constant 0 : index
    %29 = arith.index_cast %28 : i32 to index
    %c0_20 = arith.constant 0 : index
    %c8 = arith.constant 8 : index
    %30 = vector.load %arg2[%c0_19, %29, %c0_20, %c8] : memref<1x9x9x16xf32, #tpu.memory_space<vmem>>, vector<1x8x8x4xf32>
    %31 = vector.shape_cast %30 : vector<1x8x8x4xf32> to vector<8x8x4xf32>
    %32 = vector.shape_cast %31 : vector<8x8x4xf32> to vector<64x4xf32>
    %c3 = arith.constant 3 : index
    %c0_21 = arith.constant 0 : index
    %c0_22 = arith.constant 0 : index
    %33 = vector.load %arg3[%c3, %c0_21, %c0_22] : memref<9x4x8xf32, #tpu.memory_space<vmem>>, vector<1x4x8xf32>
    %34 = vector.shape_cast %33 : vector<1x4x8xf32> to vector<4x8xf32>
    %cst_23 = arith.constant dense<0.000000e+00> : vector<64x8xf32>
    %35 = tpu.matmul %32, %34, %cst_23 {dimension_numbers = #tpu.dot_dimension_numbers<[1], [0], [0], [1], [0, 0, 1, 1], [], []>} : vector<64x4xf32>, vector<4x8xf32>, vector<64x8xf32> -> vector<64x8xf32>
    %36 = arith.addf %27, %35 : vector<64x8xf32>
    %c0_i32_24 = arith.constant 0 : i32
    %37 = arith.addi %1, %c0_i32_24 : i32
    %c0_25 = arith.constant 0 : index
    %38 = arith.index_cast %37 : i32 to index
    %c0_26 = arith.constant 0 : index
    %c12 = arith.constant 12 : index
    %39 = vector.load %arg2[%c0_25, %38, %c0_26, %c12] : memref<1x9x9x16xf32, #tpu.memory_space<vmem>>, vector<1x8x8x4xf32>
    %40 = vector.shape_cast %39 : vector<1x8x8x4xf32> to vector<8x8x4xf32>
    %41 = vector.shape_cast %40 : vector<8x8x4xf32> to vector<64x4xf32>
    %c4_27 = arith.constant 4 : index
    %c0_28 = arith.constant 0 : index
    %c0_29 = arith.constant 0 : index
    %42 = vector.load %arg3[%c4_27, %c0_28, %c0_29] : memref<9x4x8xf32, #tpu.memory_space<vmem>>, vector<1x4x8xf32>
    %43 = vector.shape_cast %42 : vector<1x4x8xf32> to vector<4x8xf32>
    %cst_30 = arith.constant dense<0.000000e+00> : vector<64x8xf32>
    %44 = tpu.matmul %41, %43, %cst_30 {dimension_numbers = #tpu.dot_dimension_numbers<[1], [0], [0], [1], [0, 0, 1, 1], [], []>} : vector<64x4xf32>, vector<4x8xf32>, vector<64x8xf32> -> vector<64x8xf32>
    %45 = arith.addf %36, %44 : vector<64x8xf32>
    %c0_i32_31 = arith.constant 0 : i32
    %46 = arith.addi %1, %c0_i32_31 : i32
    %c0_32 = arith.constant 0 : index
    %47 = arith.index_cast %46 : i32 to index
    %c1_33 = arith.constant 1 : index
    %c8_34 = arith.constant 8 : index
    %48 = vector.load %arg2[%c0_32, %47, %c1_33, %c8_34] : memref<1x9x9x16xf32, #tpu.memory_space<vmem>>, vector<1x8x8x4xf32>
    %49 = vector.shape_cast %48 : vector<1x8x8x4xf32> to vector<8x8x4xf32>
    %50 = vector.shape_cast %49 : vector<8x8x4xf32> to vector<64x4xf32>
    %c5 = arith.constant 5 : index
    %c0_35 = arith.constant 0 : index
    %c0_36 = arith.constant 0 : index
    %51 = vector.load %arg3[%c5, %c0_35, %c0_36] : memref<9x4x8xf32, #tpu.memory_space<vmem>>, vector<1x4x8xf32>
    %52 = vector.shape_cast %51 : vector<1x4x8xf32> to vector<4x8xf32>
    %cst_37 = arith.constant dense<0.000000e+00> : vector<64x8xf32>
    %53 = tpu.matmul %50, %52, %cst_37 {dimension_numbers = #tpu.dot_dimension_numbers<[1], [0], [0], [1], [0, 0, 1, 1], [], []>} : vector<64x4xf32>, vector<4x8xf32>, vector<64x8xf32> -> vector<64x8xf32>
    %54 = arith.addf %45, %53 : vector<64x8xf32>
    %c1_i32 = arith.constant 1 : i32
    %55 = arith.addi %1, %c1_i32 : i32
    %c0_38 = arith.constant 0 : index
    %56 = arith.index_cast %55 : i32 to index
    %c0_39 = arith.constant 0 : index
    %c0_40 = arith.constant 0 : index
    %57 = vector.load %arg2[%c0_38, %56, %c0_39, %c0_40] : memref<1x9x9x16xf32, #tpu.memory_space<vmem>>, vector<1x8x8x4xf32>
    %58 = vector.shape_cast %57 : vector<1x8x8x4xf32> to vector<8x8x4xf32>
    %59 = vector.shape_cast %58 : vector<8x8x4xf32> to vector<64x4xf32>
    %c6 = arith.constant 6 : index
    %c0_41 = arith.constant 0 : index
    %c0_42 = arith.constant 0 : index
    %60 = vector.load %arg3[%c6, %c0_41, %c0_42] : memref<9x4x8xf32, #tpu.memory_space<vmem>>, vector<1x4x8xf32>
    %61 = vector.shape_cast %60 : vector<1x4x8xf32> to vector<4x8xf32>
    %cst_43 = arith.constant dense<0.000000e+00> : vector<64x8xf32>
    %62 = tpu.matmul %59, %61, %cst_43 {dimension_numbers = #tpu.dot_dimension_numbers<[1], [0], [0], [1], [0, 0, 1, 1], [], []>} : vector<64x4xf32>, vector<4x8xf32>, vector<64x8xf32> -> vector<64x8xf32>
    %63 = arith.addf %54, %62 : vector<64x8xf32>
    %c1_i32_44 = arith.constant 1 : i32
    %64 = arith.addi %1, %c1_i32_44 : i32
    %c0_45 = arith.constant 0 : index
    %65 = arith.index_cast %64 : i32 to index
    %c0_46 = arith.constant 0 : index
    %c4_47 = arith.constant 4 : index
    %66 = vector.load %arg2[%c0_45, %65, %c0_46, %c4_47] : memref<1x9x9x16xf32, #tpu.memory_space<vmem>>, vector<1x8x8x4xf32>
    %67 = vector.shape_cast %66 : vector<1x8x8x4xf32> to vector<8x8x4xf32>
    %68 = vector.shape_cast %67 : vector<8x8x4xf32> to vector<64x4xf32>
    %c7 = arith.constant 7 : index
    %c0_48 = arith.constant 0 : index
    %c0_49 = arith.constant 0 : index
    %69 = vector.load %arg3[%c7, %c0_48, %c0_49] : memref<9x4x8xf32, #tpu.memory_space<vmem>>, vector<1x4x8xf32>
    %70 = vector.shape_cast %69 : vector<1x4x8xf32> to vector<4x8xf32>
    %cst_50 = arith.constant dense<0.000000e+00> : vector<64x8xf32>
    %71 = tpu.matmul %68, %70, %cst_50 {dimension_numbers = #tpu.dot_dimension_numbers<[1], [0], [0], [1], [0, 0, 1, 1], [], []>} : vector<64x4xf32>, vector<4x8xf32>, vector<64x8xf32> -> vector<64x8xf32>
    %72 = arith.addf %63, %71 : vector<64x8xf32>
    %c1_i32_51 = arith.constant 1 : i32
    %73 = arith.addi %1, %c1_i32_51 : i32
    %c0_52 = arith.constant 0 : index
    %74 = arith.index_cast %73 : i32 to index
    %c1_53 = arith.constant 1 : index
    %c0_54 = arith.constant 0 : index
    %75 = vector.load %arg2[%c0_52, %74, %c1_53, %c0_54] : memref<1x9x9x16xf32, #tpu.memory_space<vmem>>, vector<1x8x8x4xf32>
    %76 = vector.shape_cast %75 : vector<1x8x8x4xf32> to vector<8x8x4xf32>
    %77 = vector.shape_cast %76 : vector<8x8x4xf32> to vector<64x4xf32>
    %c8_55 = arith.constant 8 : index
    %c0_56 = arith.constant 0 : index
    %c0_57 = arith.constant 0 : index
    %78 = vector.load %arg3[%c8_55, %c0_56, %c0_57] : memref<9x4x8xf32, #tpu.memory_space<vmem>>, vector<1x4x8xf32>
    %79 = vector.shape_cast %78 : vector<1x4x8xf32> to vector<4x8xf32>
    %cst_58 = arith.constant dense<0.000000e+00> : vector<64x8xf32>
    %80 = tpu.matmul %77, %79, %cst_58 {dimension_numbers = #tpu.dot_dimension_numbers<[1], [0], [0], [1], [0, 0, 1, 1], [], []>} : vector<64x4xf32>, vector<4x8xf32>, vector<64x8xf32> -> vector<64x8xf32>
    %81 = arith.addf %72, %80 : vector<64x8xf32>
    %c0_59 = arith.constant 0 : index
    %c0_60 = arith.constant 0 : index
    %82 = vector.load %arg4[%c0_59, %c0_60] : memref<1x8xf32, #tpu.memory_space<vmem>>, vector<1x8xf32>
    %83 = vector.broadcast %82 : vector<1x8xf32> to vector<64x8xf32>
    %84 = arith.addf %81, %83 : vector<64x8xf32>
    %cst_61 = arith.constant 0.000000e+00 : f32
    %85 = vector.broadcast %cst_61 : f32 to vector<64x8xf32>
    %86 = arith.maximumf %84, %85 : vector<64x8xf32>
    %87 = vector.shape_cast %86 : vector<64x8xf32> to vector<8x8x8xf32>
    %c0_62 = arith.constant 0 : index
    %c0_63 = arith.constant 0 : index
    %c0_64 = arith.constant 0 : index
    %c0_65 = arith.constant 0 : index
    %88 = vector.load %arg5[%c0_62, %c0_63, %c0_64, %c0_65] : memref<1x8x8x8xf32, #tpu.memory_space<vmem>>, vector<1x8x8x8xf32>
    %89 = vector.shape_cast %88 : vector<1x8x8x8xf32> to vector<8x8x8xf32>
    %90 = vector.shape_cast %87 : vector<8x8x8xf32> to vector<1x8x8x8xf32>
    tpu.vector_store %arg5[%c0_62, %c0_63, %c0_64, %c0_65], %90 {strides = array<i32>} : memref<1x8x8x8xf32, #tpu.memory_space<vmem>>, vector<1x8x8x8xf32>,
    return
  }
  func.func @transform_0(%arg0: i32, %arg1: i32) -> (i32, i32, i32, i32) {
    %c0_i32 = arith.constant 0 : i32
    %c0_i32_0 = arith.constant 0 : i32
    %c0_i32_1 = arith.constant 0 : i32
    %c0_i32_2 = arith.constant 0 : i32
    return %arg0, %c0_i32, %c0_i32_0, %c0_i32_1 : i32, i32, i32, i32
  }
  func.func @transform_1(%arg0: i32, %arg1: i32) -> (i32, i32, i32) {
    %c0_i32 = arith.constant 0 : i32
    %c0_i32_0 = arith.constant 0 : i32
    %c0_i32_1 = arith.constant 0 : i32
    %c0_i32_2 = arith.constant 0 : i32
    return %c0_i32, %c0_i32_0, %c0_i32_1 : i32, i32, i32
  }
  func.func @transform_2(%arg0: i32, %arg1: i32) -> (i32, i32) {
    %c0_i32 = arith.constant 0 : i32
    %c0_i32_0 = arith.constant 0 : i32
    %c0_i32_1 = arith.constant 0 : i32
    return %c0_i32, %c0_i32_0 : i32, i32
  }
  func.func @transform_3(%arg0: i32, %arg1: i32) -> (i32, i32, i32, i32) {
    %c0_i32 = arith.constant 0 : i32
    %c0_i32_0 = arith.constant 0 : i32
    %c0_i32_1 = arith.constant 0 : i32
    return %arg0, %arg1, %c0_i32, %c0_i32_0 : i32, i32, i32, i32
  }
}

</mosaic_0001>

<llo_original>
// kernel: tpu_custom_call.1
$region0: #{tpu_custom_call.1}
  #allocation0 [shape = 'u32[]', space=smem, size = 0x4, offset = 0x4, fixed_abs, tag = 'smem constant byte address 0x4 - core index']
  #allocation1 [shape = 'u32[72,128]{1,0:T(1,128)}', space=vmem, size = 0x9000, scoped, tag = 'internal scratch']
  %s0 = inlined_call_operand.vmem [shape: f32[2,9,9,16], index: 0, kind: input, shape index: {}]
  %s1 = inlined_call_operand.vmem [shape: f32[9,4,8], index: 1, kind: input, shape index: {}]
  %s2 = inlined_call_operand.vmem [shape: f32[1,8], index: 2, kind: input, shape index: {}]
  %s3 = inlined_call_operand.hbm [shape: f32[2,8,8,8], index: 3, kind: output, shape index: {}]
  %s4 = sld [smem:[#allocation0]]
  $region45: #{tpu_custom_call.1} parent=0
    _
  %s6 = ssub.s32 1, %s4
  %s7 = scalar_select 0, %s6, %s4
  $region1: #{tpu_custom_call.1} parent=0
    #allocation2 [shape = 'u8[65536]{0}', space=vmem, size = 0x10000, scoped, tag = 'output window, operand 0']
    #allocation3 [shape = 's32[2]{0}', space=sflag, size = 0x8, scoped, tag = 'scoped memory for tpu_custom_call.1']
    %8 = vsyncpa [#allocation3], 0
    %s9 = scalar_lea.sflag [#allocation3], 1
    %10 = vsyncpa %s9, 0
    loop: start=0, step=1, limit=4
    $region2: #{tpu_custom_call.1} parent=1 // loop_pre_header
      _
    $region3: #{tpu_custom_call.1} parent=1 // loop_header
      %s12 = sphi 0, %s16
      %p13 = scmp.ge.s32.totalorder %s12, 4
      %s19 = sphi 0, %s31
      %s20 = sphi 0, %s27
      %s21 = sphi 0, %s19
      %s22 = sphi 0, %s20
      %s23 = sphi 0, %s21
      %s24 = sphi 0, %s22
      %s34 = sphi 0, %s36
      %s37 = sphi 0, %s34
      %s38 = sphi 0, %s37
      %s54 = sphi 0, %s38
      %s58 = sphi 0, %s58
      %s60 = sphi 0, %s58
      %s61 = sphi 0, %s60
      %s75 = sphi 0, %s61
      %s79 = sphi 0, %s79
      %s81 = sphi 0, %s79
      %s82 = sphi 0, %s81
      %s96 = sphi 0, %s82
      %s104 = sphi 0, %s106
      %s107 = sphi 0, %s104
      %s108 = sphi 0, %s107
      %s124 = sphi 0, %s108
    $region4: #{tpu_custom_call.1} parent=1 // loop_header_branch
      %15 = sbr.rel (%p13) target = $region8
    $region5: #{tpu_custom_call.1} parent=1 // loop_body
      %s17 = ssub.s32 %s12, 1
      %s18 = ssub.s32 %s12, 2
      %s25 = sadd.s32 1, %s20
      %p26 = scmp.ge.s32.totalorder %s25, 1
      %s27 = scalar_select %p26, 0, %s25
      %s28 = sadd.s32 1, %s19
      %s29 = scalar_select %p26, %s28, %s19
      %p30 = scmp.ge.s32.totalorder %s29, 2
      %s31 = scalar_select %p30, 0, %s29
      %s32 = ssub.s32 %s19, %s31
      %p33 = scmp.eq.s32.totalorder %s32, 0
      %s35 = sadd.s32 %s34, 1
      %s36 = scalar_select %p33, %s34, %s35
      %p39 = pneg %p33
      %p40 = scmp.eq.s32.totalorder %s12, 1
      %p41 = por %p39, %p40
      %p42 = scmp.ne.s32.totalorder %s34, %s37
      %p43 = scmp.eq.s32.totalorder %s12, 0
      %p44 = por %p42, %p43
      %p45 = scmp.ne.s32.totalorder %s34, %s37
      %p46 = scmp.eq.s32.totalorder %s17, 1
      %p47 = por %p45, %p46
      %p48 = scmp.ne.s32.totalorder %s37, %s38
      %p49 = scmp.eq.s32.totalorder %s17, 0
      %p50 = por %p48, %p49
      %p51 = scmp.ne.s32.totalorder %s37, %s38
      %p52 = scmp.eq.s32.totalorder %s18, 1
      %p53 = por %p51, %p52
      %p55 = scmp.ne.s32.totalorder %s38, %s54
      %p56 = scmp.eq.s32.totalorder %s18, 0
      %p57 = por %p55, %p56
      %s59 = sadd.s32 %s58, 1
      %p62 = scmp.eq.s32.totalorder %s12, 1
      %p63 = scmp.ne.s32.totalorder %s58, %s60
      %p64 = scmp.eq.s32.totalorder %s12, 0
      %p65 = por %p63, %p64
      %p66 = scmp.ne.s32.totalorder %s58, %s60
      %p67 = scmp.eq.s32.totalorder %s17, 1
      %p68 = por %p66, %p67
      %p69 = scmp.ne.s32.totalorder %s60, %s61
      %p70 = scmp.eq.s32.totalorder %s17, 0
      %p71 = por %p69, %p70
      %p72 = scmp.ne.s32.totalorder %s60, %s61
      %p73 = scmp.eq.s32.totalorder %s18, 1
      %p74 = por %p72, %p73
      %p76 = scmp.ne.s32.totalorder %s61, %s75
      %p77 = scmp.eq.s32.totalorder %s18, 0
      %p78 = por %p76, %p77
      %s80 = sadd.s32 %s79, 1
      %p83 = scmp.eq.s32.totalorder %s12, 1
      %p84 = scmp.ne.s32.totalorder %s79, %s81
      %p85 = scmp.eq.s32.totalorder %s12, 0
      %p86 = por %p84, %p85
      %p87 = scmp.ne.s32.totalorder %s79, %s81
      %p88 = scmp.eq.s32.totalorder %s17, 1
      %p89 = por %p87, %p88
      %p90 = scmp.ne.s32.totalorder %s81, %s82
      %p91 = scmp.eq.s32.totalorder %s17, 0
      %p92 = por %p90, %p91
      %p93 = scmp.ne.s32.totalorder %s81, %s82
      %p94 = scmp.eq.s32.totalorder %s18, 1
      %p95 = por %p93, %p94
      %p97 = scmp.ne.s32.totalorder %s82, %s96
      %p98 = scmp.eq.s32.totalorder %s18, 0
      %p99 = por %p97, %p98
      %s100 = ssub.s32 %s19, %s31
      %s101 = ssub.s32 %s20, %s27
      %s102 = sor.u32 %s100, %s101
      %p103 = scmp.eq.s32.totalorder %s102, 0
      %s105 = sadd.s32 %s104, 1
      %s106 = scalar_select %p103, %s104, %s105
      %p109 = pneg %p103
      %p110 = scmp.eq.s32.totalorder %s12, 1
      %p111 = por %p109, %p110
      %p112 = scmp.ne.s32.totalorder %s104, %s107
      %p113 = scmp.eq.s32.totalorder %s12, 0
      %p114 = por %p112, %p113
      %p115 = scmp.ne.s32.totalorder %s104, %s107
      %p116 = scmp.eq.s32.totalorder %s17, 1
      %p117 = por %p115, %p116
      %p118 = scmp.ne.s32.totalorder %s107, %s108
      %p119 = scmp.eq.s32.totalorder %s17, 0
      %p120 = por %p118, %p119
      %p121 = scmp.ne.s32.totalorder %s107, %s108
      %p122 = scmp.eq.s32.totalorder %s18, 1
      %p123 = por %p121, %p122
      %p125 = scmp.ne.s32.totalorder %s108, %s124
      %p126 = scmp.eq.s32.totalorder %s18, 0
      %p127 = por %p125, %p126
      %p128 = scmp.le.s32.totalorder 1, %s12
      %p129 = scmp.lt.s32.totalorder %s12, 3
      %p130 = pnand %p128, %p129
      %p131 = pneg %p130
      // Predicated region
      $region9: #{tpu_custom_call.1} parent=5 // pred_check
        _
      $region10: #{tpu_custom_call.1} parent=5 // pred_check_branch
        %133 = sbr.rel (%p130) target = $region12
      $region11: #{tpu_custom_call.1} parent=5 // pred_region
        %s134 = ssub.s32 %s12, 1
        // Predicated region
        $region13: #{tpu_custom_call.1} parent=11 // pred_check
          %p135 = pneg %p71
        $region14: #{tpu_custom_call.1} parent=11 // pred_check_branch
          %137 = sbr.rel (%p135) target = $region16
        $region15: #{tpu_custom_call.1} parent=11 // pred_region
          _
        $region16: #{tpu_custom_call.1} parent=11 // pred_fallthru
          _
        // Predicated region
        $region17: #{tpu_custom_call.1} parent=11 // pred_check
          %p138 = pneg %p92
        $region18: #{tpu_custom_call.1} parent=11 // pred_check_branch
          %140 = sbr.rel (%p138) target = $region20
        $region19: #{tpu_custom_call.1} parent=11 // pred_region
          _
        $region20: #{tpu_custom_call.1} parent=11 // pred_fallthru
          _
      $region12: #{tpu_custom_call.1} parent=5 // pred_fallthru
        _
      %p141 = scmp.lt.s32.totalorder %s12, 2
      // Predicated region
      $region21: #{tpu_custom_call.1} parent=5 // pred_check
        %p142 = pneg %p141
      $region22: #{tpu_custom_call.1} parent=5 // pred_check_branch
        %144 = sbr.rel (%p142) target = $region24
      $region23: #{tpu_custom_call.1} parent=5 // pred_region
        // Predicated region
        $region25: #{tpu_custom_call.1} parent=23 // pred_check
          %p145 = pneg %p44
        $region26: #{tpu_custom_call.1} parent=23 // pred_check_branch
          %147 = sbr.rel (%p145) target = $region28
        $region27: #{tpu_custom_call.1} parent=23 // pred_region
          %p148 = scmp.lt.s32.totalorder %s19, 1
          %s149 = scalar_select %p148, %s19, 1
          %s150 = smul.addr %s149, 18
          %s151 = smul.addr %s150, 8
          %s152 = scalar_lea.vmem %s0, %s151
        $region28: #{tpu_custom_call.1} parent=23 // pred_fallthru
          _
      $region24: #{tpu_custom_call.1} parent=5 // pred_fallthru
        _
      %p153 = scmp.le.s32.totalorder 1, %s12
      %p154 = scmp.lt.s32.totalorder %s12, 3
      %p155 = pnand %p153, %p154
      %p156 = pneg %p155
      // Predicated region
      $region29: #{tpu_custom_call.1} parent=5 // pred_check
        _
      $region30: #{tpu_custom_call.1} parent=5 // pred_check_branch
        %158 = sbr.rel (%p155) target = $region32
      $region31: #{tpu_custom_call.1} parent=5 // pred_region
        %s159 = ssub.s32 %s12, 1
        %p160 = scmp.lt.s32.totalorder %s21, 1
        %s161 = scalar_select %p160, %s21, 1
        %s162 = smul.addr %s161, 18
        %s163 = smul.addr %s162, 8
        %s164 = scalar_lea.vmem %s0, %s163
        %p165 = pneg %p50
        %p166 = pneg %p47
        %p167 = pneg %p71
        %p168 = pneg %p68
        %p169 = pneg %p92
        %p170 = pneg %p89
        %p171 = pneg %p120
        %p172 = pneg %p117
        %s173 = sand.u32 %s107, 1
        %s174 = scalar_lea.sflag [#allocation3], %s173
        %s175 = sand.u32 %s107, 1
        %s176 = smul.addr %s175, 64
        %s177 = scalar_lea.vmem [#allocation2], %s176
        %p178 = scmp.lt.s32.totalorder %s21, 1
        %s179 = scalar_select %p178, %s21, 1
        %s180 = smul.addr %s179, 18
        %s181 = smul.addr %s180, 8
        %s182 = scalar_lea.vmem %s0, %s181
        %s183 = smul.u32 8, %s22
        %s184 = smul.u32 %s22, 8
        %s185 = smul.u32 %s184, 16
        %s186 = scalar_lea.vmem %s182, %s185
        %v187 = vld [vmem:[%s186] sm:$0xff]
        %v188 = vld [vmem:[%s186 + $0x10] sm:$0xff]
        %v189 = vld [vmem:[%s186 + $0x20] sm:$0xff]
        %v190 = vld [vmem:[%s186 + $0x30] sm:$0xff]
        %v191 = vld [vmem:[%s186 + $0x40] sm:$0xff]
        %v192 = vld [vmem:[%s186 + $0x50] sm:$0xff]
        %v193 = vld [vmem:[%s186 + $0x60] sm:$0xff]
        %v194 = vld [vmem:[%s186 + $0x70] sm:$0xff]
        %v195 = vld [vmem:[%s1] sm:$0xf]
        %s196 = scalar_lea.vmem %s1, 4
        %v197 = vld [vmem:[%s196] sm:$0xf]
        %206 = vrot.lane.b32.xlu0 %v187, 124
        %v207 = vpop.permute.xlu0 %206
        %208 = vrot.lane.b32.xlu0 %v188, 124
        %v209 = vpop.permute.xlu0 %208
        %210 = vrot.lane.b32.xlu0 %v189, 124
        %v211 = vpop.permute.xlu0 %210
        %212 = vrot.lane.b32.xlu0 %v190, 124
        %v213 = vpop.permute.xlu0 %212
        %214 = vrot.lane.b32.xlu0 %v191, 124
        %v215 = vpop.permute.xlu0 %214
        %216 = vrot.lane.b32.xlu0 %v192, 124
        %v217 = vpop.permute.xlu0 %216
        %218 = vrot.lane.b32.xlu0 %v193, 124
        %v219 = vpop.permute.xlu0 %218
        %220 = vrot.lane.b32.xlu0 %v194, 124
        %v221 = vpop.permute.xlu0 %220
        %vm222 = vcmask 31744
        %v223 = vsel %vm222, %v207, 0
        %v225 = vsel %vm222, %v209, 0
        %v227 = vsel %vm222, %v211, 0
        %v229 = vsel %vm222, %v213, 0
        %v231 = vsel %vm222, %v215, 0
        %v233 = vsel %vm222, %v217, 0
        %v235 = vsel %vm222, %v219, 0
        %v237 = vsel %vm222, %v221, 0
        %vm239 = vcmask 1043456
        %v241 = vsel %vm239, %v197, 0
        %243 = vmatpush.msra.mxu0 0.0
        %244 = vmatpush.msra.mxu0 0.0
        %245 = vmatpush.msra.mxu0 0.0
        %246 = vmatpush.msra.mxu0 0.0
        %247 = vmatpush.msra.mxu0 0.0
        %248 = vmatpush.msra.mxu0 0.0
        %249 = vmatpush.msra.mxu0 0.0
        %250 = vmatpush.msra.mxu0 0.0
        %251 = vmatpush.msra.mxu0 0.0
        %252 = vmatpush.msra.mxu0 0.0
        %253 = vmatpush.msra.mxu0 0.0
        %254 = vmatpush.msra.mxu0 0.0
        %255 = vmatpush.msra.mxu0 0.0
        %256 = vmatpush.msra.mxu0 0.0
        %257 = vmatpush.msra.mxu0 0.0
        %258 = vmatpush.msra.mxu0 %v241
        %259 = vmatmul.f32.gmra.mxu0 %v223
        %v260 = vpop.f32.mrf.mxu0
        %v261 = vadd.f32 0.0, %v260
        %262 = vmatmul.f32.gmra.mxu0 %v225
        %v263 = vpop.f32.mrf.mxu0
        %v264 = vadd.f32 0.0, %v263
        %265 = vmatmul.f32.gmra.mxu0 %v227
        %v266 = vpop.f32.mrf.mxu0
        %v267 = vadd.f32 0.0, %v266
        %268 = vmatmul.f32.gmra.mxu0 %v229
        %v269 = vpop.f32.mrf.mxu0
        %v270 = vadd.f32 0.0, %v269
        %271 = vmatmul.f32.gmra.mxu0 %v231
        %v272 = vpop.f32.mrf.mxu0
        %v273 = vadd.f32 0.0, %v272
        %274 = vmatmul.f32.gmra.mxu0 %v233
        %v275 = vpop.f32.mrf.mxu0
        %v276 = vadd.f32 0.0, %v275
        %277 = vmatmul.f32.gmra.mxu0 %v235
        %v278 = vpop.f32.mrf.mxu0
        %v279 = vadd.f32 0.0, %v278
        %280 = vmatmul.f32.gmra.mxu0 %v237
        %v281 = vpop.f32.mrf.mxu0
        %v282 = vadd.f32 0.0, %v281
        %283 = vdwg.mxu0
        %v284 = vsel %vm222, %v187, 0
        %v286 = vsel %vm222, %v188, 0
        %v288 = vsel %vm222, %v189, 0
        %v290 = vsel %vm222, %v190, 0
        %v292 = vsel %vm222, %v191, 0
        %v294 = vsel %vm222, %v192, 0
        %v296 = vsel %vm222, %v193, 0
        %v298 = vsel %vm222, %v194, 0
        %v301 = vsel %vm239, %v195, 0
        %303 = vmatpush.msra.mxu0 0.0
        %304 = vmatpush.msra.mxu0 0.0
        %305 = vmatpush.msra.mxu0 0.0
        %306 = vmatpush.msra.mxu0 0.0
        %307 = vmatpush.msra.mxu0 0.0
        %308 = vmatpush.msra.mxu0 0.0
        %309 = vmatpush.msra.mxu0 0.0
        %310 = vmatpush.msra.mxu0 0.0
        %311 = vmatpush.msra.mxu0 0.0
        %312 = vmatpush.msra.mxu0 0.0
        %313 = vmatpush.msra.mxu0 0.0
        %314 = vmatpush.msra.mxu0 0.0
        %315 = vmatpush.msra.mxu0 0.0
        %316 = vmatpush.msra.mxu0 0.0
        %317 = vmatpush.msra.mxu0 0.0
        %318 = vmatpush.msra.mxu0 %v301
        %319 = vmatmul.f32.gmra.mxu0 %v284
        %v320 = vpop.f32.mrf.mxu0
        %v321 = vadd.f32 %v261, %v320
        %322 = vmatmul.f32.gmra.mxu0 %v286
        %v323 = vpop.f32.mrf.mxu0
        %v324 = vadd.f32 %v264, %v323
        %325 = vmatmul.f32.gmra.mxu0 %v288
        %v326 = vpop.f32.mrf.mxu0
        %v327 = vadd.f32 %v267, %v326
        %328 = vmatmul.f32.gmra.mxu0 %v290
        %v329 = vpop.f32.mrf.mxu0
        %v330 = vadd.f32 %v270, %v329
        %331 = vmatmul.f32.gmra.mxu0 %v292
        %v332 = vpop.f32.mrf.mxu0
        %v333 = vadd.f32 %v273, %v332
        %334 = vmatmul.f32.gmra.mxu0 %v294
        %v335 = vpop.f32.mrf.mxu0
        %v336 = vadd.f32 %v276, %v335
        %337 = vmatmul.f32.gmra.mxu0 %v296
        %v338 = vpop.f32.mrf.mxu0
        %v339 = vadd.f32 %v279, %v338
        %340 = vmatmul.f32.gmra.mxu0 %v298
        %v341 = vpop.f32.mrf.mxu0
        %v342 = vadd.f32 %v282, %v341
        %343 = vdwg.mxu0
        %v344 = vld [vmem:[%s186 + $0x1] sm:$0xff]
        %v345 = vld [vmem:[%s186 + $0x11] sm:$0xff]
        %v346 = vld [vmem:[%s186 + $0x21] sm:$0xff]
        %v347 = vld [vmem:[%s186 + $0x31] sm:$0xff]
        %v348 = vld [vmem:[%s186 + $0x41] sm:$0xff]
        %v349 = vld [vmem:[%s186 + $0x51] sm:$0xff]
        %v350 = vld [vmem:[%s186 + $0x61] sm:$0xff]
        %v351 = vld [vmem:[%s186 + $0x71] sm:$0xff]
        %s352 = scalar_lea.vmem %s1, 8
        %v353 = vld [vmem:[%s352] sm:$0xf]
        %v355 = vsel %vm222, %v344, 0
        %v358 = vsel %vm222, %v345, 0
        %v361 = vsel %vm222, %v346, 0
        %v364 = vsel %vm222, %v347, 0
        %v367 = vsel %vm222, %v348, 0
        %v370 = vsel %vm222, %v349, 0
        %v373 = vsel %vm222, %v350, 0
        %v376 = vsel %vm222, %v351, 0
        %v379 = vsel %vm239, %v353, 0
        %381 = vmatpush.msra.mxu0 0.0
        %382 = vmatpush.msra.mxu0 0.0
        %383 = vmatpush.msra.mxu0 0.0
        %384 = vmatpush.msra.mxu0 0.0
        %385 = vmatpush.msra.mxu0 0.0
        %386 = vmatpush.msra.mxu0 0.0
        %387 = vmatpush.msra.mxu0 0.0
        %388 = vmatpush.msra.mxu0 0.0
        %389 = vmatpush.msra.mxu0 0.0
        %390 = vmatpush.msra.mxu0 0.0
        %391 = vmatpush.msra.mxu0 0.0
        %392 = vmatpush.msra.mxu0 0.0
        %393 = vmatpush.msra.mxu0 0.0
        %394 = vmatpush.msra.mxu0 0.0
        %395 = vmatpush.msra.mxu0 0.0
        %396 = vmatpush.msra.mxu0 %v379
        %397 = vmatmul.f32.gmra.mxu0 %v355
        %v398 = vpop.f32.mrf.mxu0
        %v399 = vadd.f32 0.0, %v398
        %400 = vmatmul.f32.gmra.mxu0 %v358
        %v401 = vpop.f32.mrf.mxu0
        %v402 = vadd.f32 0.0, %v401
        %403 = vmatmul.f32.gmra.mxu0 %v361
        %v404 = vpop.f32.mrf.mxu0
        %v405 = vadd.f32 0.0, %v404
        %406 = vmatmul.f32.gmra.mxu0 %v364
        %v407 = vpop.f32.mrf.mxu0
        %v408 = vadd.f32 0.0, %v407
        %409 = vmatmul.f32.gmra.mxu0 %v367
        %v410 = vpop.f32.mrf.mxu0
        %v411 = vadd.f32 0.0, %v410
        %412 = vmatmul.f32.gmra.mxu0 %v370
        %v413 = vpop.f32.mrf.mxu0
        %v414 = vadd.f32 0.0, %v413
        %415 = vmatmul.f32.gmra.mxu0 %v373
        %v416 = vpop.f32.mrf.mxu0
        %v417 = vadd.f32 0.0, %v416
        %418 = vmatmul.f32.gmra.mxu0 %v376
        %v419 = vpop.f32.mrf.mxu0
        %v420 = vadd.f32 0.0, %v419
        %421 = vdwg.mxu0
        %v422 = vadd.f32 %v321, %v399
        %v423 = vadd.f32 %v324, %v402
        %v424 = vadd.f32 %v327, %v405
        %v425 = vadd.f32 %v330, %v408
        %v426 = vadd.f32 %v333, %v411
        %v427 = vadd.f32 %v336, %v414
        %v428 = vadd.f32 %v339, %v417
        %v429 = vadd.f32 %v342, %v420
        %s430 = scalar_lea.vmem %s1, 12
        %v431 = vld [vmem:[%s430] sm:$0xf]
        %432 = vrot.lane.b32.xlu0 %v187, 120
        %v433 = vpop.permute.xlu0 %432
        %434 = vrot.lane.b32.xlu0 %v188, 120
        %v435 = vpop.permute.xlu0 %434
        %436 = vrot.lane.b32.xlu0 %v189, 120
        %v437 = vpop.permute.xlu0 %436
        %438 = vrot.lane.b32.xlu0 %v190, 120
        %v439 = vpop.permute.xlu0 %438
        %440 = vrot.lane.b32.xlu0 %v191, 120
        %v441 = vpop.permute.xlu0 %440
        %442 = vrot.lane.b32.xlu0 %v192, 120
        %v443 = vpop.permute.xlu0 %442
        %444 = vrot.lane.b32.xlu0 %v193, 120
        %v445 = vpop.permute.xlu0 %444
        %446 = vrot.lane.b32.xlu0 %v194, 120
        %v447 = vpop.permute.xlu0 %446
        %v448 = vsel %vm222, %v433, 0
        %v450 = vsel %vm222, %v435, 0
        %v452 = vsel %vm222, %v437, 0
        %v454 = vsel %vm222, %v439, 0
        %v456 = vsel %vm222, %v441, 0
        %v458 = vsel %vm222, %v443, 0
        %v460 = vsel %vm222, %v445, 0
        %v462 = vsel %vm222, %v447, 0
        %v465 = vsel %vm239, %v431, 0
        %467 = vmatpush.msra.mxu0 0.0
        %468 = vmatpush.msra.mxu0 0.0
        %469 = vmatpush.msra.mxu0 0.0
        %470 = vmatpush.msra.mxu0 0.0
        %471 = vmatpush.msra.mxu0 0.0
        %472 = vmatpush.msra.mxu0 0.0
        %473 = vmatpush.msra.mxu0 0.0
        %474 = vmatpush.msra.mxu0 0.0
        %475 = vmatpush.msra.mxu0 0.0
        %476 = vmatpush.msra.mxu0 0.0
        %477 = vmatpush.msra.mxu0 0.0
        %478 = vmatpush.msra.mxu0 0.0
        %479 = vmatpush.msra.mxu0 0.0
        %480 = vmatpush.msra.mxu0 0.0
        %481 = vmatpush.msra.mxu0 0.0
        %482 = vmatpush.msra.mxu0 %v465
        %483 = vmatmul.f32.gmra.mxu0 %v448
        %v484 = vpop.f32.mrf.mxu0
        %v485 = vadd.f32 0.0, %v484
        %486 = vmatmul.f32.gmra.mxu0 %v450
        %v487 = vpop.f32.mrf.mxu0
        %v488 = vadd.f32 0.0, %v487
        %489 = vmatmul.f32.gmra.mxu0 %v452
        %v490 = vpop.f32.mrf.mxu0
        %v491 = vadd.f32 0.0, %v490
        %492 = vmatmul.f32.gmra.mxu0 %v454
        %v493 = vpop.f32.mrf.mxu0
        %v494 = vadd.f32 0.0, %v493
        %495 = vmatmul.f32.gmra.mxu0 %v456
        %v496 = vpop.f32.mrf.mxu0
        %v497 = vadd.f32 0.0, %v496
        %498 = vmatmul.f32.gmra.mxu0 %v458
        %v499 = vpop.f32.mrf.mxu0
        %v500 = vadd.f32 0.0, %v499
        %501 = vmatmul.f32.gmra.mxu0 %v460
        %v502 = vpop.f32.mrf.mxu0
        %v503 = vadd.f32 0.0, %v502
        %504 = vmatmul.f32.gmra.mxu0 %v462
        %v505 = vpop.f32.mrf.mxu0
        %v506 = vadd.f32 0.0, %v505
        %507 = vdwg.mxu0
        %v508 = vadd.f32 %v422, %v485
        %v509 = vadd.f32 %v423, %v488
        %v510 = vadd.f32 %v424, %v491
        %v511 = vadd.f32 %v425, %v494
        %v512 = vadd.f32 %v426, %v497
        %v513 = vadd.f32 %v427, %v500
        %v514 = vadd.f32 %v428, %v503
        %v515 = vadd.f32 %v429, %v506
        %s516 = scalar_lea.vmem %s1, 16
        %v517 = vld [vmem:[%s516] sm:$0xf]
        %518 = vrot.lane.b32.xlu0 %v187, 116
        %v519 = vpop.permute.xlu0 %518
        %520 = vrot.lane.b32.xlu0 %v188, 116
        %v521 = vpop.permute.xlu0 %520
        %522 = vrot.lane.b32.xlu0 %v189, 116
        %v523 = vpop.permute.xlu0 %522
        %524 = vrot.lane.b32.xlu0 %v190, 116
        %v525 = vpop.permute.xlu0 %524
        %526 = vrot.lane.b32.xlu0 %v191, 116
        %v527 = vpop.permute.xlu0 %526
        %528 = vrot.lane.b32.xlu0 %v192, 116
        %v529 = vpop.permute.xlu0 %528
        %530 = vrot.lane.b32.xlu0 %v193, 116
        %v531 = vpop.permute.xlu0 %530
        %532 = vrot.lane.b32.xlu0 %v194, 116
        %v533 = vpop.permute.xlu0 %532
        %v534 = vsel %vm222, %v519, 0
        %v536 = vsel %vm222, %v521, 0
        %v538 = vsel %vm222, %v523, 0
        %v540 = vsel %vm222, %v525, 0
        %v542 = vsel %vm222, %v527, 0
        %v544 = vsel %vm222, %v529, 0
        %v546 = vsel %vm222, %v531, 0
        %v548 = vsel %vm222, %v533, 0
        %v551 = vsel %vm239, %v517, 0
        %553 = vmatpush.msra.mxu0 0.0
        %554 = vmatpush.msra.mxu0 0.0
        %555 = vmatpush.msra.mxu0 0.0
        %556 = vmatpush.msra.mxu0 0.0
        %557 = vmatpush.msra.mxu0 0.0
        %558 = vmatpush.msra.mxu0 0.0
        %559 = vmatpush.msra.mxu0 0.0
        %560 = vmatpush.msra.mxu0 0.0
        %561 = vmatpush.msra.mxu0 0.0
        %562 = vmatpush.msra.mxu0 0.0
        %563 = vmatpush.msra.mxu0 0.0
        %564 = vmatpush.msra.mxu0 0.0
        %565 = vmatpush.msra.mxu0 0.0
        %566 = vmatpush.msra.mxu0 0.0
        %567 = vmatpush.msra.mxu0 0.0
        %568 = vmatpush.msra.mxu0 %v551
        %569 = vmatmul.f32.gmra.mxu0 %v534
        %v570 = vpop.f32.mrf.mxu0
        %v571 = vadd.f32 0.0, %v570
        %572 = vmatmul.f32.gmra.mxu0 %v536
        %v573 = vpop.f32.mrf.mxu0
        %v574 = vadd.f32 0.0, %v573
        %575 = vmatmul.f32.gmra.mxu0 %v538
        %v576 = vpop.f32.mrf.mxu0
        %v577 = vadd.f32 0.0, %v576
        %578 = vmatmul.f32.gmra.mxu0 %v540
        %v579 = vpop.f32.mrf.mxu0
        %v580 = vadd.f32 0.0, %v579
        %581 = vmatmul.f32.gmra.mxu0 %v542
        %v582 = vpop.f32.mrf.mxu0
        %v583 = vadd.f32 0.0, %v582
        %584 = vmatmul.f32.gmra.mxu0 %v544
        %v585 = vpop.f32.mrf.mxu0
        %v586 = vadd.f32 0.0, %v585
        %587 = vmatmul.f32.gmra.mxu0 %v546
        %v588 = vpop.f32.mrf.mxu0
        %v589 = vadd.f32 0.0, %v588
        %590 = vmatmul.f32.gmra.mxu0 %v548
        %v591 = vpop.f32.mrf.mxu0
        %v592 = vadd.f32 0.0, %v591
        %593 = vdwg.mxu0
        %v594 = vadd.f32 %v508, %v571
        %v595 = vadd.f32 %v509, %v574
        %v596 = vadd.f32 %v510, %v577
        %v597 = vadd.f32 %v511, %v580
        %v598 = vadd.f32 %v512, %v583
        %v599 = vadd.f32 %v513, %v586
        %v600 = vadd.f32 %v514, %v589
        %v601 = vadd.f32 %v515, %v592
        %s602 = scalar_lea.vmem %s1, 20
        %v603 = vld [vmem:[%s602] sm:$0xf]
        %604 = vrot.lane.b32.xlu0 %v344, 120
        %v605 = vpop.permute.xlu0 %604
        %606 = vrot.lane.b32.xlu0 %v345, 120
        %v607 = vpop.permute.xlu0 %606
        %608 = vrot.lane.b32.xlu0 %v346, 120
        %v609 = vpop.permute.xlu0 %608
        %610 = vrot.lane.b32.xlu0 %v347, 120
        %v611 = vpop.permute.xlu0 %610
        %612 = vrot.lane.b32.xlu0 %v348, 120
        %v613 = vpop.permute.xlu0 %612
        %614 = vrot.lane.b32.xlu0 %v349, 120
        %v615 = vpop.permute.xlu0 %614
        %616 = vrot.lane.b32.xlu0 %v350, 120
        %v617 = vpop.permute.xlu0 %616
        %618 = vrot.lane.b32.xlu0 %v351, 120
        %v619 = vpop.permute.xlu0 %618
        %v620 = vsel %vm222, %v605, 0
        %v622 = vsel %vm222, %v607, 0
        %v624 = vsel %vm222, %v609, 0
        %v626 = vsel %vm222, %v611, 0
        %v628 = vsel %vm222, %v613, 0
        %v630 = vsel %vm222, %v615, 0
        %v632 = vsel %vm222, %v617, 0
        %v634 = vsel %vm222, %v619, 0
        %v637 = vsel %vm239, %v603, 0
        %639 = vmatpush.msra.mxu0 0.0
        %640 = vmatpush.msra.mxu0 0.0
        %641 = vmatpush.msra.mxu0 0.0
        %642 = vmatpush.msra.mxu0 0.0
        %643 = vmatpush.msra.mxu0 0.0
        %644 = vmatpush.msra.mxu0 0.0
        %645 = vmatpush.msra.mxu0 0.0
        %646 = vmatpush.msra.mxu0 0.0
        %647 = vmatpush.msra.mxu0 0.0
        %648 = vmatpush.msra.mxu0 0.0
        %649 = vmatpush.msra.mxu0 0.0
        %650 = vmatpush.msra.mxu0 0.0
        %651 = vmatpush.msra.mxu0 0.0
        %652 = vmatpush.msra.mxu0 0.0
        %653 = vmatpush.msra.mxu0 0.0
        %654 = vmatpush.msra.mxu0 %v637
        %655 = vmatmul.f32.gmra.mxu0 %v620
        %v656 = vpop.f32.mrf.mxu0
        %v657 = vadd.f32 0.0, %v656
        %658 = vmatmul.f32.gmra.mxu0 %v622
        %v659 = vpop.f32.mrf.mxu0
        %v660 = vadd.f32 0.0, %v659
        %661 = vmatmul.f32.gmra.mxu0 %v624
        %v662 = vpop.f32.mrf.mxu0
        %v663 = vadd.f32 0.0, %v662
        %664 = vmatmul.f32.gmra.mxu0 %v626
        %v665 = vpop.f32.mrf.mxu0
        %v666 = vadd.f32 0.0, %v665
        %667 = vmatmul.f32.gmra.mxu0 %v628
        %v668 = vpop.f32.mrf.mxu0
        %v669 = vadd.f32 0.0, %v668
        %670 = vmatmul.f32.gmra.mxu0 %v630
        %v671 = vpop.f32.mrf.mxu0
        %v672 = vadd.f32 0.0, %v671
        %673 = vmatmul.f32.gmra.mxu0 %v632
        %v674 = vpop.f32.mrf.mxu0
        %v675 = vadd.f32 0.0, %v674
        %676 = vmatmul.f32.gmra.mxu0 %v634
        %v677 = vpop.f32.mrf.mxu0
        %v678 = vadd.f32 0.0, %v677
        %679 = vdwg.mxu0
        %v680 = vadd.f32 %v594, %v657
        %v681 = vadd.f32 %v595, %v660
        %v682 = vadd.f32 %v596, %v663
        %v683 = vadd.f32 %v597, %v666
        %v684 = vadd.f32 %v598, %v669
        %v685 = vadd.f32 %v599, %v672
        %v686 = vadd.f32 %v600, %v675
        %v687 = vadd.f32 %v601, %v678
        %s688 = sadd.s32 %s184, 1
        %s689 = smul.u32 %s688, 16
        %s690 = scalar_lea.vmem %s182, %s689
        %v691 = vld [vmem:[%s690] sm:$0xff]
        %v692 = vld [vmem:[%s690 + $0x10] sm:$0xff]
        %v693 = vld [vmem:[%s690 + $0x20] sm:$0xff]
        %v694 = vld [vmem:[%s690 + $0x30] sm:$0xff]
        %v695 = vld [vmem:[%s690 + $0x40] sm:$0xff]
        %v696 = vld [vmem:[%s690 + $0x50] sm:$0xff]
        %v697 = vld [vmem:[%s690 + $0x60] sm:$0xff]
        %v698 = vld [vmem:[%s690 + $0x70] sm:$0xff]
        %s699 = scalar_lea.vmem %s1, 24
        %v700 = vld [vmem:[%s699] sm:$0xf]
        %v702 = vsel %vm222, %v691, 0
        %v705 = vsel %vm222, %v692, 0
        %v708 = vsel %vm222, %v693, 0
        %v711 = vsel %vm222, %v694, 0
        %v714 = vsel %vm222, %v695, 0
        %v717 = vsel %vm222, %v696, 0
        %v720 = vsel %vm222, %v697, 0
        %v723 = vsel %vm222, %v698, 0
        %v726 = vsel %vm239, %v700, 0
        %728 = vmatpush.msra.mxu0 0.0
        %729 = vmatpush.msra.mxu0 0.0
        %730 = vmatpush.msra.mxu0 0.0
        %731 = vmatpush.msra.mxu0 0.0
        %732 = vmatpush.msra.mxu0 0.0
        %733 = vmatpush.msra.mxu0 0.0
        %734 = vmatpush.msra.mxu0 0.0
        %735 = vmatpush.msra.mxu0 0.0
        %736 = vmatpush.msra.mxu0 0.0
        %737 = vmatpush.msra.mxu0 0.0
        %738 = vmatpush.msra.mxu0 0.0
        %739 = vmatpush.msra.mxu0 0.0
        %740 = vmatpush.msra.mxu0 0.0
        %741 = vmatpush.msra.mxu0 0.0
        %742 = vmatpush.msra.mxu0 0.0
        %743 = vmatpush.msra.mxu0 %v726
        %744 = vmatmul.f32.gmra.mxu0 %v702
        %v745 = vpop.f32.mrf.mxu0
        %v746 = vadd.f32 0.0, %v745
        %747 = vmatmul.f32.gmra.mxu0 %v705
        %v748 = vpop.f32.mrf.mxu0
        %v749 = vadd.f32 0.0, %v748
        %750 = vmatmul.f32.gmra.mxu0 %v708
        %v751 = vpop.f32.mrf.mxu0
        %v752 = vadd.f32 0.0, %v751
        %753 = vmatmul.f32.gmra.mxu0 %v711
        %v754 = vpop.f32.mrf.mxu0
        %v755 = vadd.f32 0.0, %v754
        %756 = vmatmul.f32.gmra.mxu0 %v714
        %v757 = vpop.f32.mrf.mxu0
        %v758 = vadd.f32 0.0, %v757
        %759 = vmatmul.f32.gmra.mxu0 %v717
        %v760 = vpop.f32.mrf.mxu0
        %v761 = vadd.f32 0.0, %v760
        %762 = vmatmul.f32.gmra.mxu0 %v720
        %v763 = vpop.f32.mrf.mxu0
        %v764 = vadd.f32 0.0, %v763
        %765 = vmatmul.f32.gmra.mxu0 %v723
        %v766 = vpop.f32.mrf.mxu0
        %v767 = vadd.f32 0.0, %v766
        %768 = vdwg.mxu0
        %v769 = vadd.f32 %v680, %v746
        %v770 = vadd.f32 %v681, %v749
        %v771 = vadd.f32 %v682, %v752
        %v772 = vadd.f32 %v683, %v755
        %v773 = vadd.f32 %v684, %v758
        %v774 = vadd.f32 %v685, %v761
        %v775 = vadd.f32 %v686, %v764
        %v776 = vadd.f32 %v687, %v767
        %s777 = scalar_lea.vmem %s1, 28
        %v778 = vld [vmem:[%s777] sm:$0xf]
        %779 = vrot.lane.b32.xlu0 %v691, 124
        %v780 = vpop.permute.xlu0 %779
        %781 = vrot.lane.b32.xlu0 %v692, 124
        %v782 = vpop.permute.xlu0 %781
        %783 = vrot.lane.b32.xlu0 %v693, 124
        %v784 = vpop.permute.xlu0 %783
        %785 = vrot.lane.b32.xlu0 %v694, 124
        %v786 = vpop.permute.xlu0 %785
        %787 = vrot.lane.b32.xlu0 %v695, 124
        %v788 = vpop.permute.xlu0 %787
        %789 = vrot.lane.b32.xlu0 %v696, 124
        %v790 = vpop.permute.xlu0 %789
        %791 = vrot.lane.b32.xlu0 %v697, 124
        %v792 = vpop.permute.xlu0 %791
        %793 = vrot.lane.b32.xlu0 %v698, 124
        %v794 = vpop.permute.xlu0 %793
        %v795 = vsel %vm222, %v780, 0
        %v797 = vsel %vm222, %v782, 0
        %v799 = vsel %vm222, %v784, 0
        %v801 = vsel %vm222, %v786, 0
        %v803 = vsel %vm222, %v788, 0
        %v805 = vsel %vm222, %v790, 0
        %v807 = vsel %vm222, %v792, 0
        %v809 = vsel %vm222, %v794, 0
        %v812 = vsel %vm239, %v778, 0
        %814 = vmatpush.msra.mxu0 0.0
        %815 = vmatpush.msra.mxu0 0.0
        %816 = vmatpush.msra.mxu0 0.0
        %817 = vmatpush.msra.mxu0 0.0
        %818 = vmatpush.msra.mxu0 0.0
        %819 = vmatpush.msra.mxu0 0.0
        %820 = vmatpush.msra.mxu0 0.0
        %821 = vmatpush.msra.mxu0 0.0
        %822 = vmatpush.msra.mxu0 0.0
        %823 = vmatpush.msra.mxu0 0.0
        %824 = vmatpush.msra.mxu0 0.0
        %825 = vmatpush.msra.mxu0 0.0
        %826 = vmatpush.msra.mxu0 0.0
        %827 = vmatpush.msra.mxu0 0.0
        %828 = vmatpush.msra.mxu0 0.0
        %829 = vmatpush.msra.mxu0 %v812
        %830 = vmatmul.f32.gmra.mxu0 %v795
        %v831 = vpop.f32.mrf.mxu0
        %v832 = vadd.f32 0.0, %v831
        %833 = vmatmul.f32.gmra.mxu0 %v797
        %v834 = vpop.f32.mrf.mxu0
        %v835 = vadd.f32 0.0, %v834
        %836 = vmatmul.f32.gmra.mxu0 %v799
        %v837 = vpop.f32.mrf.mxu0
        %v838 = vadd.f32 0.0, %v837
        %839 = vmatmul.f32.gmra.mxu0 %v801
        %v840 = vpop.f32.mrf.mxu0
        %v841 = vadd.f32 0.0, %v840
        %842 = vmatmul.f32.gmra.mxu0 %v803
        %v843 = vpop.f32.mrf.mxu0
        %v844 = vadd.f32 0.0, %v843
        %845 = vmatmul.f32.gmra.mxu0 %v805
        %v846 = vpop.f32.mrf.mxu0
        %v847 = vadd.f32 0.0, %v846
        %848 = vmatmul.f32.gmra.mxu0 %v807
        %v849 = vpop.f32.mrf.mxu0
        %v850 = vadd.f32 0.0, %v849
        %851 = vmatmul.f32.gmra.mxu0 %v809
        %v852 = vpop.f32.mrf.mxu0
        %v853 = vadd.f32 0.0, %v852
        %854 = vdwg.mxu0
        %v855 = vadd.f32 %v769, %v832
        %v856 = vadd.f32 %v770, %v835
        %v857 = vadd.f32 %v771, %v838
        %v858 = vadd.f32 %v772, %v841
        %v859 = vadd.f32 %v773, %v844
        %v860 = vadd.f32 %v774, %v847
        %v861 = vadd.f32 %v775, %v850
        %v862 = vadd.f32 %v776, %v853
        %v863 = vld [vmem:[%s690 + $0x1] sm:$0xff]
        %v864 = vld [vmem:[%s690 + $0x11] sm:$0xff]
        %v865 = vld [vmem:[%s690 + $0x21] sm:$0xff]
        %v866 = vld [vmem:[%s690 + $0x31] sm:$0xff]
        %v867 = vld [vmem:[%s690 + $0x41] sm:$0xff]
        %v868 = vld [vmem:[%s690 + $0x51] sm:$0xff]
        %v869 = vld [vmem:[%s690 + $0x61] sm:$0xff]
        %v870 = vld [vmem:[%s690 + $0x71] sm:$0xff]
        %s871 = scalar_lea.vmem %s1, 32
        %v872 = vld [vmem:[%s871] sm:$0xf]
        %v874 = vsel %vm222, %v863, 0
        %v877 = vsel %vm222, %v864, 0
        %v880 = vsel %vm222, %v865, 0
        %v883 = vsel %vm222, %v866, 0
        %v886 = vsel %vm222, %v867, 0
        %v889 = vsel %vm222, %v868, 0
        %v892 = vsel %vm222, %v869, 0
        %v895 = vsel %vm222, %v870, 0
        %v898 = vsel %vm239, %v872, 0
        %900 = vmatpush.msra.mxu0 0.0
        %901 = vmatpush.msra.mxu0 0.0
        %902 = vmatpush.msra.mxu0 0.0
        %903 = vmatpush.msra.mxu0 0.0
        %904 = vmatpush.msra.mxu0 0.0
        %905 = vmatpush.msra.mxu0 0.0
        %906 = vmatpush.msra.mxu0 0.0
        %907 = vmatpush.msra.mxu0 0.0
        %908 = vmatpush.msra.mxu0 0.0
        %909 = vmatpush.msra.mxu0 0.0
        %910 = vmatpush.msra.mxu0 0.0
        %911 = vmatpush.msra.mxu0 0.0
        %912 = vmatpush.msra.mxu0 0.0
        %913 = vmatpush.msra.mxu0 0.0
        %914 = vmatpush.msra.mxu0 0.0
        %915 = vmatpush.msra.mxu0 %v898
        %916 = vmatmul.f32.gmra.mxu0 %v874
        %v917 = vpop.f32.mrf.mxu0
        %v918 = vadd.f32 0.0, %v917
        %919 = vmatmul.f32.gmra.mxu0 %v877
        %v920 = vpop.f32.mrf.mxu0
        %v921 = vadd.f32 0.0, %v920
        %922 = vmatmul.f32.gmra.mxu0 %v880
        %v923 = vpop.f32.mrf.mxu0
        %v924 = vadd.f32 0.0, %v923
        %925 = vmatmul.f32.gmra.mxu0 %v883
        %v926 = vpop.f32.mrf.mxu0
        %v927 = vadd.f32 0.0, %v926
        %928 = vmatmul.f32.gmra.mxu0 %v886
        %v929 = vpop.f32.mrf.mxu0
        %v930 = vadd.f32 0.0, %v929
        %931 = vmatmul.f32.gmra.mxu0 %v889
        %v932 = vpop.f32.mrf.mxu0
        %v933 = vadd.f32 0.0, %v932
        %934 = vmatmul.f32.gmra.mxu0 %v892
        %v935 = vpop.f32.mrf.mxu0
        %v936 = vadd.f32 0.0, %v935
        %937 = vmatmul.f32.gmra.mxu0 %v895
        %v938 = vpop.f32.mrf.mxu0
        %v939 = vadd.f32 0.0, %v938
        %940 = vdwg.mxu0
        %v941 = vadd.f32 %v855, %v918
        %v942 = vadd.f32 %v856, %v921
        %v943 = vadd.f32 %v857, %v924
        %v944 = vadd.f32 %v858, %v927
        %v945 = vadd.f32 %v859, %v930
        %v946 = vadd.f32 %v860, %v933
        %v947 = vadd.f32 %v861, %v936
        %v948 = vadd.f32 %v862, %v939
        %v949 = vld [vmem:[%s2] sm:$0x1]
        %v951 = vperm.slane %v949, 0
        %v953 = vadd.f32 %v941, %v951
        %v954 = vadd.f32 %v942, %v951
        %v955 = vadd.f32 %v943, %v951
        %v956 = vadd.f32 %v944, %v951
        %v957 = vadd.f32 %v945, %v951
        %v958 = vadd.f32 %v946, %v951
        %v959 = vadd.f32 %v947, %v951
        %v960 = vadd.f32 %v948, %v951
        %v961 = vmax.f32 %v953, 0.0
        %v962 = vmax.f32 %v954, 0.0
        %v963 = vmax.f32 %v955, 0.0
        %v964 = vmax.f32 %v956, 0.0
        %v965 = vmax.f32 %v957, 0.0
        %v966 = vmax.f32 %v958, 0.0
        %v967 = vmax.f32 %v959, 0.0
        %v968 = vmax.f32 %v960, 0.0
        %vm969 = vcmask 64512
        %970 = vst.msk [vmem:[%s177] sm:$0xff] %vm969, %v961
        %971 = vst.msk [vmem:[%s177 + $0x8] sm:$0xff] %vm969, %v962
        %972 = vst.msk [vmem:[%s177 + $0x10] sm:$0xff] %vm969, %v963
        %973 = vst.msk [vmem:[%s177 + $0x18] sm:$0xff] %vm969, %v964
        %974 = vst.msk [vmem:[%s177 + $0x20] sm:$0xff] %vm969, %v965
        %975 = vst.msk [vmem:[%s177 + $0x28] sm:$0xff] %vm969, %v966
        %976 = vst.msk [vmem:[%s177 + $0x30] sm:$0xff] %vm969, %v967
        %977 = vst.msk [vmem:[%s177 + $0x38] sm:$0xff] %vm969, %v968
        %s978 = sand.u32 %s107, 1
        %s979 = scalar_lea.sflag [#allocation3], %s978
        %s980 = sand.u32 %s107, 1
        %s981 = smul.addr %s980, 64
        %s982 = scalar_lea.vmem [#allocation2], %s981
        // Predicated region
        $region33: #{tpu_custom_call.1} parent=31 // pred_check
          %p983 = pneg %p117
        $region34: #{tpu_custom_call.1} parent=31 // pred_check_branch
          %985 = sbr.rel (%p983) target = $region36
        $region35: #{tpu_custom_call.1} parent=31 // pred_region
          %s986 = smul.u32 8, %s22
          %988 = vsyncadd %s979, 0
          %s989 = smul.addr %s21, 8
          %s990 = sadd.s32 %s986, %s989
          %s991 = smul.addr %s990, 8
          %s992 = scalar_lea.hbm %s3, %s991
          %s993 = sshll.u32 %s982, 4
          %s994 = int_to_ptr.vmem [resolvable:$true] %s993
          %s995 = sshll.u32 %s992, 4
          %s996 = int_to_ptr.hbm [resolvable:$true] %s995
          %1001 = dma.vmem_to_hbm [thread:$0]  %s994, 1024, %s996, %s979, 128, 128, 8
        $region36: #{tpu_custom_call.1} parent=31 // pred_fallthru
          _
      $region32: #{tpu_custom_call.1} parent=5 // pred_fallthru
        _
      %p1002 = scmp.le.s32.totalorder 2, %s12
      // Predicated region
      $region37: #{tpu_custom_call.1} parent=5 // pred_check
        %p1003 = pneg %p1002
      $region38: #{tpu_custom_call.1} parent=5 // pred_check_branch
        %1005 = sbr.rel (%p1003) target = $region40
      $region39: #{tpu_custom_call.1} parent=5 // pred_region
        %s1006 = ssub.s32 %s12, 2
        // Predicated region
        $region41: #{tpu_custom_call.1} parent=39 // pred_check
          %p1007 = pneg %p123
        $region42: #{tpu_custom_call.1} parent=39 // pred_check_branch
          %1009 = sbr.rel (%p1007) target = $region44
        $region43: #{tpu_custom_call.1} parent=39 // pred_region
          %s1010 = sand.u32 %s108, 1
          %s1011 = scalar_lea.sflag [#allocation3], %s1010
          %s1012 = sand.u32 %s108, 1
          %s1013 = smul.addr %s1012, 64
          %s1014 = scalar_lea.vmem [#allocation2], %s1013
          %1016 = dma.done %s1011, 1024
        $region44: #{tpu_custom_call.1} parent=39 // pred_fallthru
          _
      $region40: #{tpu_custom_call.1} parent=5 // pred_fallthru
        _
    $region6: #{tpu_custom_call.1} parent=1 // loop_footer
      %s16 = sadd.s32 1, %s12
    $region7: #{tpu_custom_call.1} parent=1 // loop_footer_branch
      %11 = sbr.rel target = $region3
    $region8: #{tpu_custom_call.1} parent=1 // loop_exit
      _
    %1017 = vsyncpa [#allocation3], 1
    %s1018 = scalar_lea.sflag [#allocation3], 1
    %1019 = vsyncpa %s1018, 1

// kernel: tpu_custom_call.1
$region0: #{tpu_custom_call.1}
  #allocation0 [shape = 'u32[]', space=smem, size = 0x4, offset = 0x4, fixed_abs, tag = 'smem constant byte address 0x4 - core index']
  #allocation1 [shape = 'u32[72,128]{1,0:T(1,128)}', space=vmem, size = 0x9000, scoped, tag = 'internal scratch']
  %s0 = inlined_call_operand.vmem [shape: f32[2,9,9,16], index: 0, kind: input, shape index: {}]
  %s1 = inlined_call_operand.vmem [shape: f32[9,4,8], index: 1, kind: input, shape index: {}]
  %s2 = inlined_call_operand.vmem [shape: f32[1,8], index: 2, kind: input, shape index: {}]
  %s3 = inlined_call_operand.hbm [shape: f32[2,8,8,8], index: 3, kind: output, shape index: {}]
  %s4 = sld [smem:[#allocation0]]
  $region45: #{tpu_custom_call.1} parent=0
    _
  %s6 = ssub.s32 1, %s4
  %s7 = scalar_select 0, %s6, %s4
  $region1: #{tpu_custom_call.1} parent=0
    #allocation2 [shape = 'u8[65536]{0}', space=vmem, size = 0x10000, scoped, tag = 'output window, operand 0']
    #allocation3 [shape = 's32[2]{0}', space=sflag, size = 0x8, scoped, tag = 'scoped memory for tpu_custom_call.1']
    %8 = vsyncpa [#allocation3], 0
    %s9 = scalar_lea.sflag [#allocation3], 1
    %10 = vsyncpa %s9, 0
    loop: start=0, step=1, limit=4
    $region2: #{tpu_custom_call.1} parent=1 // loop_pre_header
      _
    $region3: #{tpu_custom_call.1} parent=1 // loop_header
      %s12 = sphi 0, %s16
      %p13 = scmp.ge.s32.totalorder %s12, 4
      %s19 = sphi 0, %s31
      %s20 = sphi 0, %s27
      %s21 = sphi 0, %s19
      %s22 = sphi 0, %s20
      %s23 = sphi 0, %s21
      %s24 = sphi 0, %s22
      %s34 = sphi 0, %s36
      %s37 = sphi 0, %s34
      %s38 = sphi 0, %s37
      %s54 = sphi 0, %s38
      %s58 = sphi 0, %s58
      %s60 = sphi 0, %s58
      %s61 = sphi 0, %s60
      %s75 = sphi 0, %s61
      %s79 = sphi 0, %s79
      %s81 = sphi 0, %s79
      %s82 = sphi 0, %s81
      %s96 = sphi 0, %s82
      %s104 = sphi 0, %s106
      %s107 = sphi 0, %s104
      %s108 = sphi 0, %s107
      %s124 = sphi 0, %s108
    $region4: #{tpu_custom_call.1} parent=1 // loop_header_branch
      %15 = sbr.rel (%p13) target = $region8
    $region5: #{tpu_custom_call.1} parent=1 // loop_body
      %s17 = ssub.s32 %s12, 1
      %s18 = ssub.s32 %s12, 2
      %s25 = sadd.s32 1, %s20
      %p26 = scmp.ge.s32.totalorder %s25, 1
      %s27 = scalar_select %p26, 0, %s25
      %s28 = sadd.s32 1, %s19
      %s29 = scalar_select %p26, %s28, %s19
      %p30 = scmp.ge.s32.totalorder %s29, 2
      %s31 = scalar_select %p30, 0, %s29
      %s32 = ssub.s32 %s19, %s31
      %p33 = scmp.eq.s32.totalorder %s32, 0
      %s35 = sadd.s32 %s34, 1
      %s36 = scalar_select %p33, %s34, %s35
      %p39 = pneg %p33
      %p40 = scmp.eq.s32.totalorder %s12, 1
      %p41 = por %p39, %p40
      %p42 = scmp.ne.s32.totalorder %s34, %s37
      %p43 = scmp.eq.s32.totalorder %s12, 0
      %p44 = por %p42, %p43
      %p45 = scmp.ne.s32.totalorder %s34, %s37
      %p46 = scmp.eq.s32.totalorder %s17, 1
      %p47 = por %p45, %p46
      %p48 = scmp.ne.s32.totalorder %s37, %s38
      %p49 = scmp.eq.s32.totalorder %s17, 0
      %p50 = por %p48, %p49
      %p51 = scmp.ne.s32.totalorder %s37, %s38
      %p52 = scmp.eq.s32.totalorder %s18, 1
      %p53 = por %p51, %p52
      %p55 = scmp.ne.s32.totalorder %s38, %s54
      %p56 = scmp.eq.s32.totalorder %s18, 0
      %p57 = por %p55, %p56
      %s59 = sadd.s32 %s58, 1
      %p62 = scmp.eq.s32.totalorder %s12, 1
      %p63 = scmp.ne.s32.totalorder %s58, %s60
      %p64 = scmp.eq.s32.totalorder %s12, 0
      %p65 = por %p63, %p64
      %p66 = scmp.ne.s32.totalorder %s58, %s60
      %p67 = scmp.eq.s32.totalorder %s17, 1
      %p68 = por %p66, %p67
      %p69 = scmp.ne.s32.totalorder %s60, %s61
      %p70 = scmp.eq.s32.totalorder %s17, 0
      %p71 = por %p69, %p70
      %p72 = scmp.ne.s32.totalorder %s60, %s61
      %p73 = scmp.eq.s32.totalorder %s18, 1
      %p74 = por %p72, %p73
      %p76 = scmp.ne.s32.totalorder %s61, %s75
      %p77 = scmp.eq.s32.totalorder %s18, 0
      %p78 = por %p76, %p77
      %s80 = sadd.s32 %s79, 1
      %p83 = scmp.eq.s32.totalorder %s12, 1
      %p84 = scmp.ne.s32.totalorder %s79, %s81
      %p85 = scmp.eq.s32.totalorder %s12, 0
      %p86 = por %p84, %p85
      %p87 = scmp.ne.s32.totalorder %s79, %s81
      %p88 = scmp.eq.s32.totalorder %s17, 1
      %p89 = por %p87, %p88
      %p90 = scmp.ne.s32.totalorder %s81, %s82
      %p91 = scmp.eq.s32.totalorder %s17, 0
      %p92 = por %p90, %p91
      %p93 = scmp.ne.s32.totalorder %s81, %s82
      %p94 = scmp.eq.s32.totalorder %s18, 1
      %p95 = por %p93, %p94
      %p97 = scmp.ne.s32.totalorder %s82, %s96
      %p98 = scmp.eq.s32.totalorder %s18, 0
      %p99 = por %p97, %p98
      %s100 = ssub.s32 %s19, %s31
      %s101 = ssub.s32 %s20, %s27
      %s102 = sor.u32 %s100, %s101
      %p103 = scmp.eq.s32.totalorder %s102, 0
      %s105 = sadd.s32 %s104, 1
      %s106 = scalar_select %p103, %s104, %s105
      %p109 = pneg %p103
      %p110 = scmp.eq.s32.totalorder %s12, 1
      %p111 = por %p109, %p110
      %p112 = scmp.ne.s32.totalorder %s104, %s107
      %p113 = scmp.eq.s32.totalorder %s12, 0
      %p114 = por %p112, %p113
      %p115 = scmp.ne.s32.totalorder %s104, %s107
      %p116 = scmp.eq.s32.totalorder %s17, 1
      %p117 = por %p115, %p116
      %p118 = scmp.ne.s32.totalorder %s107, %s108
      %p119 = scmp.eq.s32.totalorder %s17, 0
      %p120 = por %p118, %p119
      %p121 = scmp.ne.s32.totalorder %s107, %s108
      %p122 = scmp.eq.s32.totalorder %s18, 1
      %p123 = por %p121, %p122
      %p125 = scmp.ne.s32.totalorder %s108, %s124
      %p126 = scmp.eq.s32.totalorder %s18, 0
      %p127 = por %p125, %p126
      %p128 = scmp.le.s32.totalorder 1, %s12
      %p129 = scmp.lt.s32.totalorder %s12, 3
      %p130 = pnand %p128, %p129
      %p131 = pneg %p130
      // Predicated region
      $region9: #{tpu_custom_call.1} parent=5 // pred_check
        _
      $region10: #{tpu_custom_call.1} parent=5 // pred_check_branch
        %133 = sbr.rel (%p130) target = $region12
      $region11: #{tpu_custom_call.1} parent=5 // pred_region
        %s134 = ssub.s32 %s12, 1
        // Predicated region
        $region13: #{tpu_custom_call.1} parent=11 // pred_check
          %p135 = pneg %p71
        $region14: #{tpu_custom_call.1} parent=11 // pred_check_branch
          %137 = sbr.rel (%p135) target = $region16
        $region15: #{tpu_custom_call.1} parent=11 // pred_region
          _
        $region16: #{tpu_custom_call.1} parent=11 // pred_fallthru
          _
        // Predicated region
        $region17: #{tpu_custom_call.1} parent=11 // pred_check
          %p138 = pneg %p92
        $region18: #{tpu_custom_call.1} parent=11 // pred_check_branch
          %140 = sbr.rel (%p138) target = $region20
        $region19: #{tpu_custom_call.1} parent=11 // pred_region
          _
        $region20: #{tpu_custom_call.1} parent=11 // pred_fallthru
          _
      $region12: #{tpu_custom_call.1} parent=5 // pred_fallthru
        _
      %p141 = scmp.lt.s32.totalorder %s12, 2
      // Predicated region
      $region21: #{tpu_custom_call.1} parent=5 // pred_check
        %p142 = pneg %p141
      $region22: #{tpu_custom_call.1} parent=5 // pred_check_branch
        %144 = sbr.rel (%p142) target = $region24
      $region23: #{tpu_custom_call.1} parent=5 // pred_region
        // Predicated region
        $region25: #{tpu_custom_call.1} parent=23 // pred_check
          %p145 = pneg %p44
        $region26: #{tpu_custom_call.1} parent=23 // pred_check_branch
          %147 = sbr.rel (%p145) target = $region28
        $region27: #{tpu_custom_call.1} parent=23 // pred_region
          %p148 = scmp.lt.s32.totalorder %s19, 1
          %s149 = scalar_select %p148, %s19, 1
          %s150 = smul.addr %s149, 18
          %s151 = smul.addr %s150, 8
          %s152 = scalar_lea.vmem %s0, %s151
        $region28: #{tpu_custom_call.1} parent=23 // pred_fallthru
          _
      $region24: #{tpu_custom_call.1} parent=5 // pred_fallthru
        _
      %p153 = scmp.le.s32.totalorder 1, %s12
      %p154 = scmp.lt.s32.totalorder %s12, 3
      %p155 = pnand %p153, %p154
      %p156 = pneg %p155
      // Predicated region
      $region29: #{tpu_custom_call.1} parent=5 // pred_check
        _
      $region30: #{tpu_custom_call.1} parent=5 // pred_check_branch
        %158 = sbr.rel (%p155) target = $region32
      $region31: #{tpu_custom_call.1} parent=5 // pred_region
        %s159 = ssub.s32 %s12, 1
        %p160 = scmp.lt.s32.totalorder %s21, 1
        %s161 = scalar_select %p160, %s21, 1
        %s162 = smul.addr %s161, 18
        %s163 = smul.addr %s162, 8
        %s164 = scalar_lea.vmem %s0, %s163
        %p165 = pneg %p50
        %p166 = pneg %p47
        %p167 = pneg %p71
        %p168 = pneg %p68
        %p169 = pneg %p92
        %p170 = pneg %p89
        %p171 = pneg %p120
        %p172 = pneg %p117
        %s173 = sand.u32 %s107, 1
        %s174 = scalar_lea.sflag [#allocation3], %s173
        %s175 = sand.u32 %s107, 1
        %s176 = smul.addr %s175, 64
        %s177 = scalar_lea.vmem [#allocation2], %s176
        %p178 = scmp.lt.s32.totalorder %s21, 1
        %s179 = scalar_select %p178, %s21, 1
        %s180 = smul.addr %s179, 18
        %s181 = smul.addr %s180, 8
        %s182 = scalar_lea.vmem %s0, %s181
        %s183 = smul.u32 8, %s22
        %s184 = smul.u32 %s22, 8
        %s185 = smul.u32 %s184, 16
        %s186 = scalar_lea.vmem %s182, %s185
        %v187 = vld [vmem:[%s186] sm:$0xff]
        %v188 = vld [vmem:[%s186 + $0x10] sm:$0xff]
        %v189 = vld [vmem:[%s186 + $0x20] sm:$0xff]
        %v190 = vld [vmem:[%s186 + $0x30] sm:$0xff]
        %v191 = vld [vmem:[%s186 + $0x40] sm:$0xff]
        %v192 = vld [vmem:[%s186 + $0x50] sm:$0xff]
        %v193 = vld [vmem:[%s186 + $0x60] sm:$0xff]
        %v194 = vld [vmem:[%s186 + $0x70] sm:$0xff]
        %v195 = vld [vmem:[%s1] sm:$0xf]
        %s196 = scalar_lea.vmem %s1, 4
        %v197 = vld [vmem:[%s196] sm:$0xf]
        %206 = vrot.lane.b32.xlu0 %v187, 124
        %v207 = vpop.permute.xlu0 %206
        %208 = vrot.lane.b32.xlu0 %v188, 124
        %v209 = vpop.permute.xlu0 %208
        %210 = vrot.lane.b32.xlu0 %v189, 124
        %v211 = vpop.permute.xlu0 %210
        %212 = vrot.lane.b32.xlu0 %v190, 124
        %v213 = vpop.permute.xlu0 %212
        %214 = vrot.lane.b32.xlu0 %v191, 124
        %v215 = vpop.permute.xlu0 %214
        %216 = vrot.lane.b32.xlu0 %v192, 124
        %v217 = vpop.permute.xlu0 %216
        %218 = vrot.lane.b32.xlu0 %v193, 124
        %v219 = vpop.permute.xlu0 %218
        %220 = vrot.lane.b32.xlu0 %v194, 124
        %v221 = vpop.permute.xlu0 %220
        %vm222 = vcmask 31744
        %v223 = vsel %vm222, %v207, 0
        %v225 = vsel %vm222, %v209, 0
        %v227 = vsel %vm222, %v211, 0
        %v229 = vsel %vm222, %v213, 0
        %v231 = vsel %vm222, %v215, 0
        %v233 = vsel %vm222, %v217, 0
        %v235 = vsel %vm222, %v219, 0
        %v237 = vsel %vm222, %v221, 0
        %vm239 = vcmask 1043456
        %v241 = vsel %vm239, %v197, 0
        %243 = vmatpush.msra.mxu0 0.0
        %244 = vmatpush.msra.mxu0 0.0
        %245 = vmatpush.msra.mxu0 0.0
        %246 = vmatpush.msra.mxu0 0.0
        %247 = vmatpush.msra.mxu0 0.0
        %248 = vmatpush.msra.mxu0 0.0
        %249 = vmatpush.msra.mxu0 0.0
        %250 = vmatpush.msra.mxu0 0.0
        %251 = vmatpush.msra.mxu0 0.0
        %252 = vmatpush.msra.mxu0 0.0
        %253 = vmatpush.msra.mxu0 0.0
        %254 = vmatpush.msra.mxu0 0.0
        %255 = vmatpush.msra.mxu0 0.0
        %256 = vmatpush.msra.mxu0 0.0
        %257 = vmatpush.msra.mxu0 0.0
        %258 = vmatpush.msra.mxu0 %v241
        %259 = vmatmul.f32.gmra.mxu0 %v223
        %v260 = vpop.f32.mrf.mxu0
        %v261 = vadd.f32 0.0, %v260
        %262 = vmatmul.f32.gmra.mxu0 %v225
        %v263 = vpop.f32.mrf.mxu0
        %v264 = vadd.f32 0.0, %v263
        %265 = vmatmul.f32.gmra.mxu0 %v227
        %v266 = vpop.f32.mrf.mxu0
        %v267 = vadd.f32 0.0, %v266
        %268 = vmatmul.f32.gmra.mxu0 %v229
        %v269 = vpop.f32.mrf.mxu0
        %v270 = vadd.f32 0.0, %v269
        %271 = vmatmul.f32.gmra.mxu0 %v231
        %v272 = vpop.f32.mrf.mxu0
        %v273 = vadd.f32 0.0, %v272
        %274 = vmatmul.f32.gmra.mxu0 %v233
        %v275 = vpop.f32.mrf.mxu0
        %v276 = vadd.f32 0.0, %v275
        %277 = vmatmul.f32.gmra.mxu0 %v235
        %v278 = vpop.f32.mrf.mxu0
        %v279 = vadd.f32 0.0, %v278
        %280 = vmatmul.f32.gmra.mxu0 %v237
        %v281 = vpop.f32.mrf.mxu0
        %v282 = vadd.f32 0.0, %v281
        %283 = vdwg.mxu0
        %v284 = vsel %vm222, %v187, 0
        %v286 = vsel %vm222, %v188, 0
        %v288 = vsel %vm222, %v189, 0
        %v290 = vsel %vm222, %v190, 0
        %v292 = vsel %vm222, %v191, 0
        %v294 = vsel %vm222, %v192, 0
        %v296 = vsel %vm222, %v193, 0
        %v298 = vsel %vm222, %v194, 0
        %v301 = vsel %vm239, %v195, 0
        %303 = vmatpush.msra.mxu0 0.0
        %304 = vmatpush.msra.mxu0 0.0
        %305 = vmatpush.msra.mxu0 0.0
        %306 = vmatpush.msra.mxu0 0.0
        %307 = vmatpush.msra.mxu0 0.0
        %308 = vmatpush.msra.mxu0 0.0
        %309 = vmatpush.msra.mxu0 0.0
        %310 = vmatpush.msra.mxu0 0.0
        %311 = vmatpush.msra.mxu0 0.0
        %312 = vmatpush.msra.mxu0 0.0
        %313 = vmatpush.msra.mxu0 0.0
        %314 = vmatpush.msra.mxu0 0.0
        %315 = vmatpush.msra.mxu0 0.0
        %316 = vmatpush.msra.mxu0 0.0
        %317 = vmatpush.msra.mxu0 0.0
        %318 = vmatpush.msra.mxu0 %v301
        %319 = vmatmul.f32.gmra.mxu0 %v284
        %v320 = vpop.f32.mrf.mxu0
        %v321 = vadd.f32 %v261, %v320
        %322 = vmatmul.f32.gmra.mxu0 %v286
        %v323 = vpop.f32.mrf.mxu0
        %v324 = vadd.f32 %v264, %v323
        %325 = vmatmul.f32.gmra.mxu0 %v288
        %v326 = vpop.f32.mrf.mxu0
        %v327 = vadd.f32 %v267, %v326
        %328 = vmatmul.f32.gmra.mxu0 %v290
        %v329 = vpop.f32.mrf.mxu0
        %v330 = vadd.f32 %v270, %v329
        %331 = vmatmul.f32.gmra.mxu0 %v292
        %v332 = vpop.f32.mrf.mxu0
        %v333 = vadd.f32 %v273, %v332
        %334 = vmatmul.f32.gmra.mxu0 %v294
        %v335 = vpop.f32.mrf.mxu0
        %v336 = vadd.f32 %v276, %v335
        %337 = vmatmul.f32.gmra.mxu0 %v296
        %v338 = vpop.f32.mrf.mxu0
        %v339 = vadd.f32 %v279, %v338
        %340 = vmatmul.f32.gmra.mxu0 %v298
        %v341 = vpop.f32.mrf.mxu0
        %v342 = vadd.f32 %v282, %v341
        %343 = vdwg.mxu0
        %v344 = vld [vmem:[%s186 + $0x1] sm:$0xff]
        %v345 = vld [vmem:[%s186 + $0x11] sm:$0xff]
        %v346 = vld [vmem:[%s186 + $0x21] sm:$0xff]
        %v347 = vld [vmem:[%s186 + $0x31] sm:$0xff]
        %v348 = vld [vmem:[%s186 + $0x41] sm:$0xff]
        %v349 = vld [vmem:[%s186 + $0x51] sm:$0xff]
        %v350 = vld [vmem:[%s186 + $0x61] sm:$0xff]
        %v351 = vld [vmem:[%s186 + $0x71] sm:$0xff]
        %s352 = scalar_lea.vmem %s1, 8
        %v353 = vld [vmem:[%s352] sm:$0xf]
        %v355 = vsel %vm222, %v344, 0
        %v358 = vsel %vm222, %v345, 0
        %v361 = vsel %vm222, %v346, 0
        %v364 = vsel %vm222, %v347, 0
        %v367 = vsel %vm222, %v348, 0
        %v370 = vsel %vm222, %v349, 0
        %v373 = vsel %vm222, %v350, 0
        %v376 = vsel %vm222, %v351, 0
        %v379 = vsel %vm239, %v353, 0
        %381 = vmatpush.msra.mxu0 0.0
        %382 = vmatpush.msra.mxu0 0.0
        %383 = vmatpush.msra.mxu0 0.0
        %384 = vmatpush.msra.mxu0 0.0
        %385 = vmatpush.msra.mxu0 0.0
        %386 = vmatpush.msra.mxu0 0.0
        %387 = vmatpush.msra.mxu0 0.0
        %388 = vmatpush.msra.mxu0 0.0
        %389 = vmatpush.msra.mxu0 0.0
        %390 = vmatpush.msra.mxu0 0.0
        %391 = vmatpush.msra.mxu0 0.0
        %392 = vmatpush.msra.mxu0 0.0
        %393 = vmatpush.msra.mxu0 0.0
        %394 = vmatpush.msra.mxu0 0.0
        %395 = vmatpush.msra.mxu0 0.0
        %396 = vmatpush.msra.mxu0 %v379
        %397 = vmatmul.f32.gmra.mxu0 %v355
        %v398 = vpop.f32.mrf.mxu0
        %v399 = vadd.f32 0.0, %v398
        %400 = vmatmul.f32.gmra.mxu0 %v358
        %v401 = vpop.f32.mrf.mxu0
        %v402 = vadd.f32 0.0, %v401
        %403 = vmatmul.f32.gmra.mxu0 %v361
        %v404 = vpop.f32.mrf.mxu0
        %v405 = vadd.f32 0.0, %v404
        %406 = vmatmul.f32.gmra.mxu0 %v364
        %v407 = vpop.f32.mrf.mxu0
        %v408 = vadd.f32 0.0, %v407
        %409 = vmatmul.f32.gmra.mxu0 %v367
        %v410 = vpop.f32.mrf.mxu0
        %v411 = vadd.f32 0.0, %v410
        %412 = vmatmul.f32.gmra.mxu0 %v370
        %v413 = vpop.f32.mrf.mxu0
        %v414 = vadd.f32 0.0, %v413
        %415 = vmatmul.f32.gmra.mxu0 %v373
        %v416 = vpop.f32.mrf.mxu0
        %v417 = vadd.f32 0.0, %v416
        %418 = vmatmul.f32.gmra.mxu0 %v376
        %v419 = vpop.f32.mrf.mxu0
        %v420 = vadd.f32 0.0, %v419
        %421 = vdwg.mxu0
        %v422 = vadd.f32 %v321, %v399
        %v423 = vadd.f32 %v324, %v402
        %v424 = vadd.f32 %v327, %v405
        %v425 = vadd.f32 %v330, %v408
        %v426 = vadd.f32 %v333, %v411
        %v427 = vadd.f32 %v336, %v414
        %v428 = vadd.f32 %v339, %v417
        %v429 = vadd.f32 %v342, %v420
        %s430 = scalar_lea.vmem %s1, 12
        %v431 = vld [vmem:[%s430] sm:$0xf]
        %432 = vrot.lane.b32.xlu0 %v187, 120
        %v433 = vpop.permute.xlu0 %432
        %434 = vrot.lane.b32.xlu0 %v188, 120
        %v435 = vpop.permute.xlu0 %434
        %436 = vrot.lane.b32.xlu0 %v189, 120
        %v437 = vpop.permute.xlu0 %436
        %438 = vrot.lane.b32.xlu0 %v190, 120
        %v439 = vpop.permute.xlu0 %438
        %440 = vrot.lane.b32.xlu0 %v191, 120
        %v441 = vpop.permute.xlu0 %440
        %442 = vrot.lane.b32.xlu0 %v192, 120
        %v443 = vpop.permute.xlu0 %442
        %444 = vrot.lane.b32.xlu0 %v193, 120
        %v445 = vpop.permute.xlu0 %444
        %446 = vrot.lane.b32.xlu0 %v194, 120
        %v447 = vpop.permute.xlu0 %446
        %v448 = vsel %vm222, %v433, 0
        %v450 = vsel %vm222, %v435, 0
        %v452 = vsel %vm222, %v437, 0
        %v454 = vsel %vm222, %v439, 0
        %v456 = vsel %vm222, %v441, 0
        %v458 = vsel %vm222, %v443, 0
        %v460 = vsel %vm222, %v445, 0
        %v462 = vsel %vm222, %v447, 0
        %v465 = vsel %vm239, %v431, 0
        %467 = vmatpush.msra.mxu0 0.0
        %468 = vmatpush.msra.mxu0 0.0
        %469 = vmatpush.msra.mxu0 0.0
        %470 = vmatpush.msra.mxu0 0.0
        %471 = vmatpush.msra.mxu0 0.0
        %472 = vmatpush.msra.mxu0 0.0
        %473 = vmatpush.msra.mxu0 0.0
        %474 = vmatpush.msra.mxu0 0.0
        %475 = vmatpush.msra.mxu0 0.0
        %476 = vmatpush.msra.mxu0 0.0
        %477 = vmatpush.msra.mxu0 0.0
        %478 = vmatpush.msra.mxu0 0.0
        %479 = vmatpush.msra.mxu0 0.0
        %480 = vmatpush.msra.mxu0 0.0
        %481 = vmatpush.msra.mxu0 0.0
        %482 = vmatpush.msra.mxu0 %v465
        %483 = vmatmul.f32.gmra.mxu0 %v448
        %v484 = vpop.f32.mrf.mxu0
        %v485 = vadd.f32 0.0, %v484
        %486 = vmatmul.f32.gmra.mxu0 %v450
        %v487 = vpop.f32.mrf.mxu0
        %v488 = vadd.f32 0.0, %v487
        %489 = vmatmul.f32.gmra.mxu0 %v452
        %v490 = vpop.f32.mrf.mxu0
        %v491 = vadd.f32 0.0, %v490
        %492 = vmatmul.f32.gmra.mxu0 %v454
        %v493 = vpop.f32.mrf.mxu0
        %v494 = vadd.f32 0.0, %v493
        %495 = vmatmul.f32.gmra.mxu0 %v456
        %v496 = vpop.f32.mrf.mxu0
        %v497 = vadd.f32 0.0, %v496
        %498 = vmatmul.f32.gmra.mxu0 %v458
        %v499 = vpop.f32.mrf.mxu0
        %v500 = vadd.f32 0.0, %v499
        %501 = vmatmul.f32.gmra.mxu0 %v460
        %v502 = vpop.f32.mrf.mxu0
        %v503 = vadd.f32 0.0, %v502
        %504 = vmatmul.f32.gmra.mxu0 %v462
        %v505 = vpop.f32.mrf.mxu0
        %v506 = vadd.f32 0.0, %v505
        %507 = vdwg.mxu0
        %v508 = vadd.f32 %v422, %v485
        %v509 = vadd.f32 %v423, %v488
        %v510 = vadd.f32 %v424, %v491
        %v511 = vadd.f32 %v425, %v494
        %v512 = vadd.f32 %v426, %v497
        %v513 = vadd.f32 %v427, %v500
        %v514 = vadd.f32 %v428, %v503
        %v515 = vadd.f32 %v429, %v506
        %s516 = scalar_lea.vmem %s1, 16
        %v517 = vld [vmem:[%s516] sm:$0xf]
        %518 = vrot.lane.b32.xlu0 %v187, 116
        %v519 = vpop.permute.xlu0 %518
        %520 = vrot.lane.b32.xlu0 %v188, 116
        %v521 = vpop.permute.xlu0 %520
        %522 = vrot.lane.b32.xlu0 %v189, 116
        %v523 = vpop.permute.xlu0 %522
        %524 = vrot.lane.b32.xlu0 %v190, 116
        %v525 = vpop.permute.xlu0 %524
        %526 = vrot.lane.b32.xlu0 %v191, 116
        %v527 = vpop.permute.xlu0 %526
        %528 = vrot.lane.b32.xlu0 %v192, 116
        %v529 = vpop.permute.xlu0 %528
        %530 = vrot.lane.b32.xlu0 %v193, 116
        %v531 = vpop.permute.xlu0 %530
        %532 = vrot.lane.b32.xlu0 %v194, 116
        %v533 = vpop.permute.xlu0 %532
        %v534 = vsel %vm222, %v519, 0
        %v536 = vsel %vm222, %v521, 0
        %v538 = vsel %vm222, %v523, 0
        %v540 = vsel %vm222, %v525, 0
        %v542 = vsel %vm222, %v527, 0
        %v544 = vsel %vm222, %v529, 0
        %v546 = vsel %vm222, %v531, 0
        %v548 = vsel %vm222, %v533, 0
        %v551 = vsel %vm239, %v517, 0
        %553 = vmatpush.msra.mxu0 0.0
        %554 = vmatpush.msra.mxu0 0.0
        %555 = vmatpush.msra.mxu0 0.0
        %556 = vmatpush.msra.mxu0 0.0
        %557 = vmatpush.msra.mxu0 0.0
        %558 = vmatpush.msra.mxu0 0.0
        %559 = vmatpush.msra.mxu0 0.0
        %560 = vmatpush.msra.mxu0 0.0
        %561 = vmatpush.msra.mxu0 0.0
        %562 = vmatpush.msra.mxu0 0.0
        %563 = vmatpush.msra.mxu0 0.0
        %564 = vmatpush.msra.mxu0 0.0
        %565 = vmatpush.msra.mxu0 0.0
        %566 = vmatpush.msra.mxu0 0.0
        %567 = vmatpush.msra.mxu0 0.0
        %568 = vmatpush.msra.mxu0 %v551
        %569 = vmatmul.f32.gmra.mxu0 %v534
        %v570 = vpop.f32.mrf.mxu0
        %v571 = vadd.f32 0.0, %v570
        %572 = vmatmul.f32.gmra.mxu0 %v536
        %v573 = vpop.f32.mrf.mxu0
        %v574 = vadd.f32 0.0, %v573
        %575 = vmatmul.f32.gmra.mxu0 %v538
        %v576 = vpop.f32.mrf.mxu0
        %v577 = vadd.f32 0.0, %v576
        %578 = vmatmul.f32.gmra.mxu0 %v540
        %v579 = vpop.f32.mrf.mxu0
        %v580 = vadd.f32 0.0, %v579
        %581 = vmatmul.f32.gmra.mxu0 %v542
        %v582 = vpop.f32.mrf.mxu0
        %v583 = vadd.f32 0.0, %v582
        %584 = vmatmul.f32.gmra.mxu0 %v544
        %v585 = vpop.f32.mrf.mxu0
        %v586 = vadd.f32 0.0, %v585
        %587 = vmatmul.f32.gmra.mxu0 %v546
        %v588 = vpop.f32.mrf.mxu0
        %v589 = vadd.f32 0.0, %v588
        %590 = vmatmul.f32.gmra.mxu0 %v548
        %v591 = vpop.f32.mrf.mxu0
        %v592 = vadd.f32 0.0, %v591
        %593 = vdwg.mxu0
        %v594 = vadd.f32 %v508, %v571
        %v595 = vadd.f32 %v509, %v574
        %v596 = vadd.f32 %v510, %v577
        %v597 = vadd.f32 %v511, %v580
        %v598 = vadd.f32 %v512, %v583
        %v599 = vadd.f32 %v513, %v586
        %v600 = vadd.f32 %v514, %v589
        %v601 = vadd.f32 %v515, %v592
        %s602 = scalar_lea.vmem %s1, 20
        %v603 = vld [vmem:[%s602] sm:$0xf]
        %604 = vrot.lane.b32.xlu0 %v344, 120
        %v605 = vpop.permute.xlu0 %604
        %606 = vrot.lane.b32.xlu0 %v345, 120
        %v607 = vpop.permute.xlu0 %606
        %608 = vrot.lane.b32.xlu0 %v346, 120
        %v609 = vpop.permute.xlu0 %608
        %610 = vrot.lane.b32.xlu0 %v347, 120
        %v611 = vpop.permute.xlu0 %610
        %612 = vrot.lane.b32.xlu0 %v348, 120
        %v613 = vpop.permute.xlu0 %612
        %614 = vrot.lane.b32.xlu0 %v349, 120
        %v615 = vpop.permute.xlu0 %614
        %616 = vrot.lane.b32.xlu0 %v350, 120
        %v617 = vpop.permute.xlu0 %616
        %618 = vrot.lane.b32.xlu0 %v351, 120
        %v619 = vpop.permute.xlu0 %618
        %v620 = vsel %vm222, %v605, 0
        %v622 = vsel %vm222, %v607, 0
        %v624 = vsel %vm222, %v609, 0
        %v626 = vsel %vm222, %v611, 0
        %v628 = vsel %vm222, %v613, 0
        %v630 = vsel %vm222, %v615, 0
        %v632 = vsel %vm222, %v617, 0
        %v634 = vsel %vm222, %v619, 0
        %v637 = vsel %vm239, %v603, 0
        %639 = vmatpush.msra.mxu0 0.0
        %640 = vmatpush.msra.mxu0 0.0
        %641 = vmatpush.msra.mxu0 0.0
        %642 = vmatpush.msra.mxu0 0.0
        %643 = vmatpush.msra.mxu0 0.0
        %644 = vmatpush.msra.mxu0 0.0
        %645 = vmatpush.msra.mxu0 0.0
        %646 = vmatpush.msra.mxu0 0.0
        %647 = vmatpush.msra.mxu0 0.0
        %648 = vmatpush.msra.mxu0 0.0
        %649 = vmatpush.msra.mxu0 0.0
        %650 = vmatpush.msra.mxu0 0.0
        %651 = vmatpush.msra.mxu0 0.0
        %652 = vmatpush.msra.mxu0 0.0
        %653 = vmatpush.msra.mxu0 0.0
        %654 = vmatpush.msra.mxu0 %v637
        %655 = vmatmul.f32.gmra.mxu0 %v620
        %v656 = vpop.f32.mrf.mxu0
        %v657 = vadd.f32 0.0, %v656
        %658 = vmatmul.f32.gmra.mxu0 %v622
        %v659 = vpop.f32.mrf.mxu0
        %v660 = vadd.f32 0.0, %v659
        %661 = vmatmul.f32.gmra.mxu0 %v624
        %v662 = vpop.f32.mrf.mxu0
        %v663 = vadd.f32 0.0, %v662
        %664 = vmatmul.f32.gmra.mxu0 %v626
        %v665 = vpop.f32.mrf.mxu0
        %v666 = vadd.f32 0.0, %v665
        %667 = vmatmul.f32.gmra.mxu0 %v628
        %v668 = vpop.f32.mrf.mxu0
        %v669 = vadd.f32 0.0, %v668
        %670 = vmatmul.f32.gmra.mxu0 %v630
        %v671 = vpop.f32.mrf.mxu0
        %v672 = vadd.f32 0.0, %v671
        %673 = vmatmul.f32.gmra.mxu0 %v632
        %v674 = vpop.f32.mrf.mxu0
        %v675 = vadd.f32 0.0, %v674
        %676 = vmatmul.f32.gmra.mxu0 %v634
        %v677 = vpop.f32.mrf.mxu0
        %v678 = vadd.f32 0.0, %v677
        %679 = vdwg.mxu0
        %v680 = vadd.f32 %v594, %v657
        %v681 = vadd.f32 %v595, %v660
        %v682 = vadd.f32 %v596, %v663
        %v683 = vadd.f32 %v597, %v666
        %v684 = vadd.f32 %v598, %v669
        %v685 = vadd.f32 %v599, %v672
        %v686 = vadd.f32 %v600, %v675
        %v687 = vadd.f32 %v601, %v678
        %s688 = sadd.s32 %s184, 1
        %s689 = smul.u32 %s688, 16
        %s690 = scalar_lea.vmem %s182, %s689
        %v691 = vld [vmem:[%s690] sm:$0xff]
        %v692 = vld [vmem:[%s690 + $0x10] sm:$0xff]
        %v693 = vld [vmem:[%s690 + $0x20] sm:$0xff]
        %v694 = vld [vmem:[%s690 + $0x30] sm:$0xff]
        %v695 = vld [vmem:[%s690 + $0x40] sm:$0xff]
        %v696 = vld [vmem:[%s690 + $0x50] sm:$0xff]
        %v697 = vld [vmem:[%s690 + $0x60] sm:$0xff]
        %v698 = vld [vmem:[%s690 + $0x70] sm:$0xff]
        %s699 = scalar_lea.vmem %s1, 24
        %v700 = vld [vmem:[%s699] sm:$0xf]
        %v702 = vsel %vm222, %v691, 0
        %v705 = vsel %vm222, %v692, 0
        %v708 = vsel %vm222, %v693, 0
        %v711 = vsel %vm222, %v694, 0
        %v714 = vsel %vm222, %v695, 0
        %v717 = vsel %vm222, %v696, 0
        %v720 = vsel %vm222, %v697, 0
        %v723 = vsel %vm222, %v698, 0
        %v726 = vsel %vm239, %v700, 0
        %728 = vmatpush.msra.mxu0 0.0
        %729 = vmatpush.msra.mxu0 0.0
        %730 = vmatpush.msra.mxu0 0.0
        %731 = vmatpush.msra.mxu0 0.0
        %732 = vmatpush.msra.mxu0 0.0
        %733 = vmatpush.msra.mxu0 0.0
        %734 = vmatpush.msra.mxu0 0.0
        %735 = vmatpush.msra.mxu0 0.0
        %736 = vmatpush.msra.mxu0 0.0
        %737 = vmatpush.msra.mxu0 0.0
        %738 = vmatpush.msra.mxu0 0.0
        %739 = vmatpush.msra.mxu0 0.0
        %740 = vmatpush.msra.mxu0 0.0
        %741 = vmatpush.msra.mxu0 0.0
        %742 = vmatpush.msra.mxu0 0.0
        %743 = vmatpush.msra.mxu0 %v726
        %744 = vmatmul.f32.gmra.mxu0 %v702
        %v745 = vpop.f32.mrf.mxu0
        %v746 = vadd.f32 0.0, %v745
        %747 = vmatmul.f32.gmra.mxu0 %v705
        %v748 = vpop.f32.mrf.mxu0
        %v749 = vadd.f32 0.0, %v748
        %750 = vmatmul.f32.gmra.mxu0 %v708
        %v751 = vpop.f32.mrf.mxu0
        %v752 = vadd.f32 0.0, %v751
        %753 = vmatmul.f32.gmra.mxu0 %v711
        %v754 = vpop.f32.mrf.mxu0
        %v755 = vadd.f32 0.0, %v754
        %756 = vmatmul.f32.gmra.mxu0 %v714
        %v757 = vpop.f32.mrf.mxu0
        %v758 = vadd.f32 0.0, %v757
        %759 = vmatmul.f32.gmra.mxu0 %v717
        %v760 = vpop.f32.mrf.mxu0
        %v761 = vadd.f32 0.0, %v760
        %762 = vmatmul.f32.gmra.mxu0 %v720
        %v763 = vpop.f32.mrf.mxu0
        %v764 = vadd.f32 0.0, %v763
        %765 = vmatmul.f32.gmra.mxu0 %v723
        %v766 = vpop.f32.mrf.mxu0
        %v767 = vadd.f32 0.0, %v766
        %768 = vdwg.mxu0
        %v769 = vadd.f32 %v680, %v746
        %v770 = vadd.f32 %v681, %v749
        %v771 = vadd.f32 %v682, %v752
        %v772 = vadd.f32 %v683, %v755
        %v773 = vadd.f32 %v684, %v758
        %v774 = vadd.f32 %v685, %v761
        %v775 = vadd.f32 %v686, %v764
        %v776 = vadd.f32 %v687, %v767
        %s777 = scalar_lea.vmem %s1, 28
        %v778 = vld [vmem:[%s777] sm:$0xf]
        %779 = vrot.lane.b32.xlu0 %v691, 124
        %v780 = vpop.permute.xlu0 %779
        %781 = vrot.lane.b32.xlu0 %v692, 124
        %v782 = vpop.permute.xlu0 %781
        %783 = vrot.lane.b32.xlu0 %v693, 124
        %v784 = vpop.permute.xlu0 %783
        %785 = vrot.lane.b32.xlu0 %v694, 124
        %v786 = vpop.permute.xlu0 %785
        %787 = vrot.lane.b32.xlu0 %v695, 124
        %v788 = vpop.permute.xlu0 %787
        %789 = vrot.lane.b32.xlu0 %v696, 124
        %v790 = vpop.permute.xlu0 %789
        %791 = vrot.lane.b32.xlu0 %v697, 124
        %v792 = vpop.permute.xlu0 %791
        %793 = vrot.lane.b32.xlu0 %v698, 124
        %v794 = vpop.permute.xlu0 %793
        %v795 = vsel %vm222, %v780, 0
        %v797 = vsel %vm222, %v782, 0
        %v799 = vsel %vm222, %v784, 0
        %v801 = vsel %vm222, %v786, 0
        %v803 = vsel %vm222, %v788, 0
        %v805 = vsel %vm222, %v790, 0
        %v807 = vsel %vm222, %v792, 0
        %v809 = vsel %vm222, %v794, 0
        %v812 = vsel %vm239, %v778, 0
        %814 = vmatpush.msra.mxu0 0.0
        %815 = vmatpush.msra.mxu0 0.0
        %816 = vmatpush.msra.mxu0 0.0
        %817 = vmatpush.msra.mxu0 0.0
        %818 = vmatpush.msra.mxu0 0.0
        %819 = vmatpush.msra.mxu0 0.0
        %820 = vmatpush.msra.mxu0 0.0
        %821 = vmatpush.msra.mxu0 0.0
        %822 = vmatpush.msra.mxu0 0.0
        %823 = vmatpush.msra.mxu0 0.0
        %824 = vmatpush.msra.mxu0 0.0
        %825 = vmatpush.msra.mxu0 0.0
        %826 = vmatpush.msra.mxu0 0.0
        %827 = vmatpush.msra.mxu0 0.0
        %828 = vmatpush.msra.mxu0 0.0
        %829 = vmatpush.msra.mxu0 %v812
        %830 = vmatmul.f32.gmra.mxu0 %v795
        %v831 = vpop.f32.mrf.mxu0
        %v832 = vadd.f32 0.0, %v831
        %833 = vmatmul.f32.gmra.mxu0 %v797
        %v834 = vpop.f32.mrf.mxu0
        %v835 = vadd.f32 0.0, %v834
        %836 = vmatmul.f32.gmra.mxu0 %v799
        %v837 = vpop.f32.mrf.mxu0
        %v838 = vadd.f32 0.0, %v837
        %839 = vmatmul.f32.gmra.mxu0 %v801
        %v840 = vpop.f32.mrf.mxu0
        %v841 = vadd.f32 0.0, %v840
        %842 = vmatmul.f32.gmra.mxu0 %v803
        %v843 = vpop.f32.mrf.mxu0
        %v844 = vadd.f32 0.0, %v843
        %845 = vmatmul.f32.gmra.mxu0 %v805
        %v846 = vpop.f32.mrf.mxu0
        %v847 = vadd.f32 0.0, %v846
        %848 = vmatmul.f32.gmra.mxu0 %v807
        %v849 = vpop.f32.mrf.mxu0
        %v850 = vadd.f32 0.0, %v849
        %851 = vmatmul.f32.gmra.mxu0 %v809
        %v852 = vpop.f32.mrf.mxu0
        %v853 = vadd.f32 0.0, %v852
        %854 = vdwg.mxu0
        %v855 = vadd.f32 %v769, %v832
        %v856 = vadd.f32 %v770, %v835
        %v857 = vadd.f32 %v771, %v838
        %v858 = vadd.f32 %v772, %v841
        %v859 = vadd.f32 %v773, %v844
        %v860 = vadd.f32 %v774, %v847
        %v861 = vadd.f32 %v775, %v850
        %v862 = vadd.f32 %v776, %v853
        %v863 = vld [vmem:[%s690 + $0x1] sm:$0xff]
        %v864 = vld [vmem:[%s690 + $0x11] sm:$0xff]
        %v865 = vld [vmem:[%s690 + $0x21] sm:$0xff]
        %v866 = vld [vmem:[%s690 + $0x31] sm:$0xff]
        %v867 = vld [vmem:[%s690 + $0x41] sm:$0xff]
        %v868 = vld [vmem:[%s690 + $0x51] sm:$0xff]
        %v869 = vld [vmem:[%s690 + $0x61] sm:$0xff]
        %v870 = vld [vmem:[%s690 + $0x71] sm:$0xff]
        %s871 = scalar_lea.vmem %s1, 32
        %v872 = vld [vmem:[%s871] sm:$0xf]
        %v874 = vsel %vm222, %v863, 0
        %v877 = vsel %vm222, %v864, 0
        %v880 = vsel %vm222, %v865, 0
        %v883 = vsel %vm222, %v866, 0
        %v886 = vsel %vm222, %v867, 0
        %v889 = vsel %vm222, %v868, 0
        %v892 = vsel %vm222, %v869, 0
        %v895 = vsel %vm222, %v870, 0
        %v898 = vsel %vm239, %v872, 0
        %900 = vmatpush.msra.mxu0 0.0
        %901 = vmatpush.msra.mxu0 0.0
        %902 = vmatpush.msra.mxu0 0.0
        %903 = vmatpush.msra.mxu0 0.0
        %904 = vmatpush.msra.mxu0 0.0
        %905 = vmatpush.msra.mxu0 0.0
        %906 = vmatpush.msra.mxu0 0.0
        %907 = vmatpush.msra.mxu0 0.0
        %908 = vmatpush.msra.mxu0 0.0
        %909 = vmatpush.msra.mxu0 0.0
        %910 = vmatpush.msra.mxu0 0.0
        %911 = vmatpush.msra.mxu0 0.0
        %912 = vmatpush.msra.mxu0 0.0
        %913 = vmatpush.msra.mxu0 0.0
        %914 = vmatpush.msra.mxu0 0.0
        %915 = vmatpush.msra.mxu0 %v898
        %916 = vmatmul.f32.gmra.mxu0 %v874
        %v917 = vpop.f32.mrf.mxu0
        %v918 = vadd.f32 0.0, %v917
        %919 = vmatmul.f32.gmra.mxu0 %v877
        %v920 = vpop.f32.mrf.mxu0
        %v921 = vadd.f32 0.0, %v920
        %922 = vmatmul.f32.gmra.mxu0 %v880
        %v923 = vpop.f32.mrf.mxu0
        %v924 = vadd.f32 0.0, %v923
        %925 = vmatmul.f32.gmra.mxu0 %v883
        %v926 = vpop.f32.mrf.mxu0
        %v927 = vadd.f32 0.0, %v926
        %928 = vmatmul.f32.gmra.mxu0 %v886
        %v929 = vpop.f32.mrf.mxu0
        %v930 = vadd.f32 0.0, %v929
        %931 = vmatmul.f32.gmra.mxu0 %v889
        %v932 = vpop.f32.mrf.mxu0
        %v933 = vadd.f32 0.0, %v932
        %934 = vmatmul.f32.gmra.mxu0 %v892
        %v935 = vpop.f32.mrf.mxu0
        %v936 = vadd.f32 0.0, %v935
        %937 = vmatmul.f32.gmra.mxu0 %v895
        %v938 = vpop.f32.mrf.mxu0
        %v939 = vadd.f32 0.0, %v938
        %940 = vdwg.mxu0
        %v941 = vadd.f32 %v855, %v918
        %v942 = vadd.f32 %v856, %v921
        %v943 = vadd.f32 %v857, %v924
        %v944 = vadd.f32 %v858, %v927
        %v945 = vadd.f32 %v859, %v930
        %v946 = vadd.f32 %v860, %v933
        %v947 = vadd.f32 %v861, %v936
        %v948 = vadd.f32 %v862, %v939
        %v949 = vld [vmem:[%s2] sm:$0x1]
        %v951 = vperm.slane %v949, 0
        %v953 = vadd.f32 %v941, %v951
        %v954 = vadd.f32 %v942, %v951
        %v955 = vadd.f32 %v943, %v951
        %v956 = vadd.f32 %v944, %v951
        %v957 = vadd.f32 %v945, %v951
        %v958 = vadd.f32 %v946, %v951
        %v959 = vadd.f32 %v947, %v951
        %v960 = vadd.f32 %v948, %v951
        %v961 = vmax.f32 %v953, 0.0
        %v962 = vmax.f32 %v954, 0.0
        %v963 = vmax.f32 %v955, 0.0
        %v964 = vmax.f32 %v956, 0.0
        %v965 = vmax.f32 %v957, 0.0
        %v966 = vmax.f32 %v958, 0.0
        %v967 = vmax.f32 %v959, 0.0
        %v968 = vmax.f32 %v960, 0.0
        %vm969 = vcmask 64512
        %970 = vst.msk [vmem:[%s177] sm:$0xff] %vm969, %v961
        %971 = vst.msk [vmem:[%s177 + $0x8] sm:$0xff] %vm969, %v962
        %972 = vst.msk [vmem:[%s177 + $0x10] sm:$0xff] %vm969, %v963
        %973 = vst.msk [vmem:[%s177 + $0x18] sm:$0xff] %vm969, %v964
        %974 = vst.msk [vmem:[%s177 + $0x20] sm:$0xff] %vm969, %v965
        %975 = vst.msk [vmem:[%s177 + $0x28] sm:$0xff] %vm969, %v966
        %976 = vst.msk [vmem:[%s177 + $0x30] sm:$0xff] %vm969, %v967
        %977 = vst.msk [vmem:[%s177 + $0x38] sm:$0xff] %vm969, %v968
        %s978 = sand.u32 %s107, 1
        %s979 = scalar_lea.sflag [#allocation3], %s978
        %s980 = sand.u32 %s107, 1
        %s981 = smul.addr %s980, 64
        %s982 = scalar_lea.vmem [#allocation2], %s981
        // Predicated region
        $region33: #{tpu_custom_call.1} parent=31 // pred_check
          %p983 = pneg %p117
        $region34: #{tpu_custom_call.1} parent=31 // pred_check_branch
          %985 = sbr.rel (%p983) target = $region36
        $region35: #{tpu_custom_call.1} parent=31 // pred_region
          %s986 = smul.u32 8, %s22
          %988 = vsyncadd %s979, 0
          %s989 = smul.addr %s21, 8
          %s990 = sadd.s32 %s986, %s989
          %s991 = smul.addr %s990, 8
          %s992 = scalar_lea.hbm %s3, %s991
          %s993 = sshll.u32 %s982, 4
          %s994 = int_to_ptr.vmem [resolvable:$true] %s993
          %s995 = sshll.u32 %s992, 4
          %s996 = int_to_ptr.hbm [resolvable:$true] %s995
          %1001 = dma.vmem_to_hbm [thread:$0]  %s994, 1024, %s996, %s979, 128, 128, 8
        $region36: #{tpu_custom_call.1} parent=31 // pred_fallthru
          _
      $region32: #{tpu_custom_call.1} parent=5 // pred_fallthru
        _
      %p1002 = scmp.le.s32.totalorder 2, %s12
      // Predicated region
      $region37: #{tpu_custom_call.1} parent=5 // pred_check
        %p1003 = pneg %p1002
      $region38: #{tpu_custom_call.1} parent=5 // pred_check_branch
        %1005 = sbr.rel (%p1003) target = $region40
      $region39: #{tpu_custom_call.1} parent=5 // pred_region
        %s1006 = ssub.s32 %s12, 2
        // Predicated region
        $region41: #{tpu_custom_call.1} parent=39 // pred_check
          %p1007 = pneg %p123
        $region42: #{tpu_custom_call.1} parent=39 // pred_check_branch
          %1009 = sbr.rel (%p1007) target = $region44
        $region43: #{tpu_custom_call.1} parent=39 // pred_region
          %s1010 = sand.u32 %s108, 1
          %s1011 = scalar_lea.sflag [#allocation3], %s1010
          %s1012 = sand.u32 %s108, 1
          %s1013 = smul.addr %s1012, 64
          %s1014 = scalar_lea.vmem [#allocation2], %s1013
          %1016 = dma.done %s1011, 1024
        $region44: #{tpu_custom_call.1} parent=39 // pred_fallthru
          _
      $region40: #{tpu_custom_call.1} parent=5 // pred_fallthru
        _
    $region6: #{tpu_custom_call.1} parent=1 // loop_footer
      %s16 = sadd.s32 1, %s12
    $region7: #{tpu_custom_call.1} parent=1 // loop_footer_branch
      %11 = sbr.rel target = $region3
    $region8: #{tpu_custom_call.1} parent=1 // loop_exit
      _
    %1017 = vsyncpa [#allocation3], 1
    %s1018 = scalar_lea.sflag [#allocation3], 1
    %1019 = vsyncpa %s1018, 1

</llo_original>
